<compile_context>
chip_gen: v7x
topology: tpu7x:2x2x1
jax: 0.10.0
libtpu: 0.0.40
codegen_flags: <defaults>
</compile_context>

<pallas_src>
import jax
import jax.numpy as jnp
import numpy as np
from jax.experimental import pallas as pl
from jax.experimental.pallas import tpu as pltpu


# ----------------------------------------------------------------------------
# Pallas kernel: full forward pass (unit1 -> unit2 -> fc) for one batch block
# ----------------------------------------------------------------------------
def brain_kernel(x_ref,                       # (BN, L, Cin)          f32, streamed
                 w1m_ref, w1c_ref, w1p_ref,   # (Cin,  2*Cout) bf16 each (per tap)
                 b1_ref,                      # (1, 2*Cout)           f32
                 w2m_ref, w2c_ref, w2p_ref,   # (Cout, 2*Cout) bf16 each (per tap)
                 b2_ref,                      # (1, 2*Cout)           f32
                 fcw_ref,                     # (BN*L, Cout)          f32 (hoisted bcast)
                 nfirst_ref, nlast_ref,       # (BN*L, 1)             f32 0/1 masks
                 fcb_ref,                     # (1, 1)                f32 (SMEM)
                 out_ref):                    # (BN, 1)               f32
    bn, seq_len, c_in = x_ref.shape
    rows = bn * seq_len
    c_out = b1_ref.shape[1] // 2

    nfirst = nfirst_ref[...]                  # 0.0 where l == 0      (x[l-1] invalid)
    nlast = nlast_ref[...]                    # 0.0 where l == L-1    (x[l+1] invalid)

    def gated_conv(h2d, wm_ref, wc_ref, wp_ref, b_ref):
        # Temporal shifts via XLU sublane roll + per-batch boundary masks.
        h_prev = (pltpu.roll(h2d, 1, 0) * nfirst).astype(jnp.bfloat16)
        h_next = (pltpu.roll(h2d, rows - 1, 0) * nlast).astype(jnp.bfloat16)
        h_cur = h2d.astype(jnp.bfloat16)
        # Three tiny MXU dots (no lane-axis concat); f32 accumulation.
        y = (jnp.dot(h_prev, wm_ref[...], preferred_element_type=jnp.float32)
             + jnp.dot(h_cur, wc_ref[...], preferred_element_type=jnp.float32)
             + jnp.dot(h_next, wp_ref[...], preferred_element_type=jnp.float32))
        y = y + b_ref[...]
        g1 = jax.nn.sigmoid(y[:, :c_out])                            # conv1 branch
        g2 = jnp.maximum(y[:, c_out:], 0.0)                          # conv2 branch
        return g1 * g2                                               # (rows, Cout) f32

    # 2-D (rows, C) working view across both units (L folded into sublanes).
    x2d = x_ref[...].reshape(rows, c_in)
    o1 = gated_conv(x2d, w1m_ref, w1c_ref, w1p_ref, b1_ref)
    o2 = gated_conv(o1, w2m_ref, w2c_ref, w2p_ref, b2_ref)

    # Final Linear(C*L -> 1) without the (rows,Cout)->(bn,L*Cout) relayout:
    # elementwise multiply with the hoisted fc-weight broadcast, lane reduce,
    # small (rows,1)->(bn,L) repack, lane reduce again.
    per_row = jnp.sum(o2 * fcw_ref[...], axis=1, keepdims=True)      # (rows, 1)
    per_batch = per_row.reshape(bn, seq_len)                         # (bn, L)
    out = jnp.sum(per_batch, axis=1, keepdims=True) + fcb_ref[0, 0]  # (bn, 1)
    out_ref[...] = out.astype(out_ref.dtype)


# ----------------------------------------------------------------------------
# One-time parameter preparation (per-tap split + branch fusion + bf16 cast).
# ----------------------------------------------------------------------------
def prepare_params(params):
    (w1a, b1a, w1b, b1b, w2a, b2a, w2b, b2b, fc_w, fc_b) = params
    c_out = w1a.shape[0]
    length = fc_w.shape[1] // c_out

    def tap(wa, wb, k):
        # Conv1d weight (Cout, Cin, 3), tap k -> (Cin, 2*Cout) [sigmoid | relu branch]
        return jnp.concatenate(
            [jnp.transpose(wa[:, :, k], (1, 0)),
             jnp.transpose(wb[:, :, k], (1, 0))], axis=1).astype(jnp.bfloat16)

    def fuse_bias(ba, bb):
        return jnp.concatenate([ba, bb]).reshape(1, -1).astype(jnp.float32)

    # fc weight: PyTorch (1, Cout*L) channel-major flatten -> (L, Cout) so that
    # fcw_lc[l, c] == fc_w[0, c*L + l].
    fcw_lc = jnp.transpose(fc_w.reshape(c_out, length), (1, 0)).astype(jnp.float32)
    fcb = fc_b.reshape(1, 1).astype(jnp.float32)

    return (tap(w1a, w1b, 0), tap(w1a, w1b, 1), tap(w1a, w1b, 2), fuse_bias(b1a, b1b),
            tap(w2a, w2b, 0), tap(w2a, w2b, 1), tap(w2a, w2b, 2), fuse_bias(b2a, b2b),
            fcw_lc, fcb)


def _round_up(x, m):
    return ((x + m - 1) // m) * m


# ----------------------------------------------------------------------------
# Wrapper: batch-gridded pallas_call (activation already channels-last)
# ----------------------------------------------------------------------------
def brain_forward_pallas(x_nlc, prepped, *, max_bn=512):
    """x_nlc: (N, L, Cin) float32 (channels-last).  prepped = prepare_params(...)."""
    (w1m, w1c, w1p, b1, w2m, w2c, w2p, b2, fcw_lc, fcb) = prepped
    n, length, c_in = x_nlc.shape
    c_out = fcw_lc.shape[1]

    # Batch block: multiple of 8, capped, and sized for >=2 grid steps when N
    # allows (so v7x megacore can shard the "parallel" batch axis across TCs).
    bn = min(max_bn, _round_up(pl.cdiv(n, 2), 8))
    bn = max(8, min(bn, _round_up(n, 8)))
    grid_n = pl.cdiv(n, bn)
    n_pad = grid_n * bn
    if n_pad != n:
        x_nlc = jnp.pad(x_nlc, ((0, n_pad - n), (0, 0), (0, 0)))

    rows = bn * length

    # Grid-invariant constants, hoisted out of the kernel body.
    pos = np.arange(rows, dtype=np.int32) % length
    nfirst = jnp.asarray((pos != 0).astype(np.float32).reshape(rows, 1))
    nlast = jnp.asarray((pos != length - 1).astype(np.float32).reshape(rows, 1))
    fcw_rows = jnp.tile(fcw_lc, (bn, 1))            # (rows, Cout), once per call

    # Generous but bounded scoped-VMEM budget: 2x double-buffered x block +
    # resident constants + intermediates, with headroom; tiny vs all defaults.
    vmem_bytes = min(32 * 1024 * 1024,
                     2 * (bn * length * c_in * 4)
                     + rows * (c_out + 2) * 4
                     + rows * 12 * c_out * 4
                     + (8 << 20))

    out = pl.pallas_call(
        brain_kernel,
        out_shape=jax.ShapeDtypeStruct((n_pad, 1), jnp.float32),
        grid=(grid_n,),
        in_specs=[
            pl.BlockSpec((bn, length, c_in), lambda i: (i, 0, 0)),   # x streamed
            pl.BlockSpec(w1m.shape, lambda i: (0, 0)),               # weights +
            pl.BlockSpec(w1c.shape, lambda i: (0, 0)),               # constants stay
            pl.BlockSpec(w1p.shape, lambda i: (0, 0)),               # resident in
            pl.BlockSpec(b1.shape, lambda i: (0, 0)),                # VMEM across
            pl.BlockSpec(w2m.shape, lambda i: (0, 0)),               # grid steps
            pl.BlockSpec(w2c.shape, lambda i: (0, 0)),
            pl.BlockSpec(w2p.shape, lambda i: (0, 0)),
            pl.BlockSpec(b2.shape, lambda i: (0, 0)),
            pl.BlockSpec((rows, c_out), lambda i: (0, 0)),           # fc weight bcast
            pl.BlockSpec((rows, 1), lambda i: (0, 0)),               # not-first mask
            pl.BlockSpec((rows, 1), lambda i: (0, 0)),               # not-last mask
            pl.BlockSpec((1, 1), lambda i: (0, 0),
                         memory_space=pltpu.MemorySpace.SMEM),       # fc bias scalar
        ],
        out_specs=pl.BlockSpec((bn, 1), lambda i: (i, 0)),
        compiler_params=pltpu.CompilerParams(
            dimension_semantics=("parallel",),
            vmem_limit_bytes=vmem_bytes),
    )(x_nlc, w1m, w1c, w1p, b1, w2m, w2c, w2p, b2, fcw_rows, nfirst, nlast, fcb)

    return out[:n] if n_pad != n else out


# ----------------------------------------------------------------------------
# Pure-JAX reference (mirrors the PyTorch forward exactly, NCL layout, f32)
# ----------------------------------------------------------------------------
def brain_forward_ref(x_ncl, params):
    (w1a, b1a, w1b, b1b, w2a, b2a, w2b, b2b, fc_w, fc_b) = params

    def conv1d(h, w, b):
        y = jax.lax.conv_general_dilated(
            h, w, window_strides=(1,), padding=[(1, 1)],
            dimension_numbers=('NCH', 'OIH', 'NCH'))
        return y + b[None, :, None]

    def unit(h, wa, ba, wb, bb):
        return jax.nn.sigmoid(conv1d(h, wa, ba)) * jnp.maximum(conv1d(h, wb, bb), 0.0)

    o1 = unit(x_ncl, w1a, b1a, w1b, b1b)
    o2 = unit(o1, w2a, b2a, w2b, b2b)
    flat = o2.reshape(o2.shape[0], -1)            # channel-major flatten (N, C*L)
    return flat @ fc_w.T + fc_b[None, :]


# ----------------------------------------------------------------------------
if __name__ == "__main__":
    # Small shapes consistent with the module (Conv1d over (N, C, L)); N=16 so
    # the batch grid has 2 real "parallel" steps (blocks of 8 batches).
    N, C_IN, C_OUT, L = 16, 4, 8, 16

    key = jax.random.PRNGKey(0)
    ks = jax.random.split(key, 11)

    def init(k, shape, scale=0.1):
        return (scale * jax.random.normal(k, shape)).astype(jnp.float32)

    params = (
        init(ks[0], (C_OUT, C_IN, 3)),  init(ks[1], (C_OUT,)),   # basic_unit1.conv1
        init(ks[2], (C_OUT, C_IN, 3)),  init(ks[3], (C_OUT,)),   # basic_unit1.conv2
        init(ks[4], (C_OUT, C_OUT, 3)), init(ks[5], (C_OUT,)),   # basic_unit2.conv1
        init(ks[6], (C_OUT, C_OUT, 3)), init(ks[7], (C_OUT,)),   # basic_unit2.conv2
        init(ks[8], (1, C_OUT * L)),    init(ks[9], (1,)),       # fc
    )

    x = jax.random.normal(ks[10], (N, C_IN, L), dtype=jnp.float32)

    prepped = prepare_params(params)                 # one-time weight re-layout
    x_nlc = jnp.transpose(x, (0, 2, 1))              # one-time NCL -> NLC, outside hot path

    fwd = jax.jit(brain_forward_pallas)
    out = jax.block_until_ready(fwd(x_nlc, prepped))
    ref = jax.block_until_ready(brain_forward_ref(x, params))

    # bf16 MXU operands in the kernel vs f32 reference -> loosened tolerance.
    np.testing.assert_allclose(np.asarray(out), np.asarray(ref), rtol=2e-2, atol=2e-2)

    print("KERNEL_OK")
</pallas_src>

<mosaic_0001>
module attributes {stable_mosaic.version = 11 : i64} {
  func.func @brain_kernel(%arg0: i32, %arg1: memref<8x16x4xf32, #tpu.memory_space<vmem>>, %arg2: memref<4x16xbf16, #tpu.memory_space<vmem>>, %arg3: memref<4x16xbf16, #tpu.memory_space<vmem>>, %arg4: memref<4x16xbf16, #tpu.memory_space<vmem>>, %arg5: memref<1x16xf32, #tpu.memory_space<vmem>>, %arg6: memref<8x16xbf16, #tpu.memory_space<vmem>>, %arg7: memref<8x16xbf16, #tpu.memory_space<vmem>>, %arg8: memref<8x16xbf16, #tpu.memory_space<vmem>>, %arg9: memref<1x16xf32, #tpu.memory_space<vmem>>, %arg10: memref<128x8xf32, #tpu.memory_space<vmem>>, %arg11: memref<128x1xf32, #tpu.memory_space<vmem>>, %arg12: memref<128x1xf32, #tpu.memory_space<vmem>>, %arg13: memref<1x1xf32, #tpu.memory_space<smem>>, %arg14: memref<8x1xf32, #tpu.memory_space<vmem>>) attributes {dimension_semantics = [#tpu.dimension_semantics<parallel>], iteration_bounds = array<i64: 2>, scalar_prefetch = 0 : i64, scratch_operands = 0 : i64, tpu.core_type = #tpu.core_type<tc>, window_params = [{transform_indices = @transform_0, window_bounds = array<i64: 8, 16, 4>}, {pipeline_mode = #tpu.pipeline_mode<synchronous>, transform_indices = @transform_1, window_bounds = array<i64: 4, 16>}, {pipeline_mode = #tpu.pipeline_mode<synchronous>, transform_indices = @transform_2, window_bounds = array<i64: 4, 16>}, {pipeline_mode = #tpu.pipeline_mode<synchronous>, transform_indices = @transform_3, window_bounds = array<i64: 4, 16>}, {pipeline_mode = #tpu.pipeline_mode<synchronous>, transform_indices = @transform_4, window_bounds = array<i64: 1, 16>}, {pipeline_mode = #tpu.pipeline_mode<synchronous>, transform_indices = @transform_5, window_bounds = array<i64: 8, 16>}, {pipeline_mode = #tpu.pipeline_mode<synchronous>, transform_indices = @transform_6, window_bounds = array<i64: 8, 16>}, {pipeline_mode = #tpu.pipeline_mode<synchronous>, transform_indices = @transform_7, window_bounds = array<i64: 8, 16>}, {pipeline_mode = #tpu.pipeline_mode<synchronous>, transform_indices = @transform_8, window_bounds = array<i64: 1, 16>}, {pipeline_mode = #tpu.pipeline_mode<synchronous>, transform_indices = @transform_9, window_bounds = array<i64: 128, 8>}, {pipeline_mode = #tpu.pipeline_mode<synchronous>, transform_indices = @transform_10, window_bounds = array<i64: 128, 1>}, {pipeline_mode = #tpu.pipeline_mode<synchronous>, transform_indices = @transform_11, window_bounds = array<i64: 128, 1>}, {transform_indices = @transform_12, window_bounds = array<i64: 1, 1>}, {transform_indices = @transform_13, window_bounds = array<i64: 8, 1>}]} {
    %c0 = arith.constant 0 : index
    %c0_0 = arith.constant 0 : index
    %0 = vector.load %arg11[%c0, %c0_0] : memref<128x1xf32, #tpu.memory_space<vmem>>, vector<128x1xf32>
    %c0_1 = arith.constant 0 : index
    %c0_2 = arith.constant 0 : index
    %1 = vector.load %arg12[%c0_1, %c0_2] : memref<128x1xf32, #tpu.memory_space<vmem>>, vector<128x1xf32>
    %c0_3 = arith.constant 0 : index
    %c0_4 = arith.constant 0 : index
    %c0_5 = arith.constant 0 : index
    %2 = vector.load %arg1[%c0_3, %c0_4, %c0_5] : memref<8x16x4xf32, #tpu.memory_space<vmem>>, vector<8x16x4xf32>
    %3 = vector.shape_cast %2 : vector<8x16x4xf32> to vector<128x4xf32>
    %c1_i32 = arith.constant 1 : i32
    %4 = tpu.dynamic_rotate %3 by %c1_i32 dim 0 : vector<128x4xf32>, i32 -> vector<128x4xf32>
    %5 = vector.broadcast %0 : vector<128x1xf32> to vector<128x4xf32>
    %6 = arith.mulf %4, %5 : vector<128x4xf32>
    %7 = arith.truncf %6 : vector<128x4xf32> to vector<128x4xbf16>
    %c127_i32 = arith.constant 127 : i32
    %8 = tpu.dynamic_rotate %3 by %c127_i32 dim 0 : vector<128x4xf32>, i32 -> vector<128x4xf32>
    %9 = vector.broadcast %1 : vector<128x1xf32> to vector<128x4xf32>
    %10 = arith.mulf %8, %9 : vector<128x4xf32>
    %11 = arith.truncf %10 : vector<128x4xf32> to vector<128x4xbf16>
    %12 = arith.truncf %3 : vector<128x4xf32> to vector<128x4xbf16>
    %c0_6 = arith.constant 0 : index
    %c0_7 = arith.constant 0 : index
    %13 = vector.load %arg2[%c0_6, %c0_7] : memref<4x16xbf16, #tpu.memory_space<vmem>>, vector<4x16xbf16>
    %cst = arith.constant dense<0.000000e+00> : vector<128x16xf32>
    %14 = tpu.matmul %7, %13, %cst {dimension_numbers = #tpu.dot_dimension_numbers<[1], [0], [0], [1], [0, 0, 1, 1], [], []>} : vector<128x4xbf16>, vector<4x16xbf16>, vector<128x16xf32> -> vector<128x16xf32>
    %c0_8 = arith.constant 0 : index
    %c0_9 = arith.constant 0 : index
    %15 = vector.load %arg3[%c0_8, %c0_9] : memref<4x16xbf16, #tpu.memory_space<vmem>>, vector<4x16xbf16>
    %cst_10 = arith.constant dense<0.000000e+00> : vector<128x16xf32>
    %16 = tpu.matmul %12, %15, %cst_10 {dimension_numbers = #tpu.dot_dimension_numbers<[1], [0], [0], [1], [0, 0, 1, 1], [], []>} : vector<128x4xbf16>, vector<4x16xbf16>, vector<128x16xf32> -> vector<128x16xf32>
    %17 = arith.addf %14, %16 : vector<128x16xf32>
    %c0_11 = arith.constant 0 : index
    %c0_12 = arith.constant 0 : index
    %18 = vector.load %arg4[%c0_11, %c0_12] : memref<4x16xbf16, #tpu.memory_space<vmem>>, vector<4x16xbf16>
    %cst_13 = arith.constant dense<0.000000e+00> : vector<128x16xf32>
    %19 = tpu.matmul %11, %18, %cst_13 {dimension_numbers = #tpu.dot_dimension_numbers<[1], [0], [0], [1], [0, 0, 1, 1], [], []>} : vector<128x4xbf16>, vector<4x16xbf16>, vector<128x16xf32> -> vector<128x16xf32>
    %20 = arith.addf %17, %19 : vector<128x16xf32>
    %c0_14 = arith.constant 0 : index
    %c0_15 = arith.constant 0 : index
    %21 = vector.load %arg5[%c0_14, %c0_15] : memref<1x16xf32, #tpu.memory_space<vmem>>, vector<1x16xf32>
    %22 = vector.broadcast %21 : vector<1x16xf32> to vector<128x16xf32>
    %23 = arith.addf %20, %22 : vector<128x16xf32>
    %24 = vector.extract_strided_slice %23 {offsets = [0, 0], sizes = [128, 8], strides = [1, 1]} : vector<128x16xf32> to vector<128x8xf32>
    %25 = arith.negf %24 : vector<128x8xf32>
    %26 = math.exp %25 : vector<128x8xf32>
    %cst_16 = arith.constant 1.000000e+00 : f32
    %27 = vector.broadcast %cst_16 : f32 to vector<128x8xf32>
    %28 = arith.addf %27, %26 : vector<128x8xf32>
    %29 = arith.divf %27, %28 : vector<128x8xf32>
    %30 = vector.extract_strided_slice %23 {offsets = [0, 8], sizes = [128, 8], strides = [1, 1]} : vector<128x16xf32> to vector<128x8xf32>
    %cst_17 = arith.constant 0.000000e+00 : f32
    %31 = vector.broadcast %cst_17 : f32 to vector<128x8xf32>
    %32 = arith.maximumf %30, %31 : vector<128x8xf32>
    %33 = arith.mulf %29, %32 : vector<128x8xf32>
    %c1_i32_18 = arith.constant 1 : i32
    %34 = tpu.dynamic_rotate %33 by %c1_i32_18 dim 0 : vector<128x8xf32>, i32 -> vector<128x8xf32>
    %35 = vector.broadcast %0 : vector<128x1xf32> to vector<128x8xf32>
    %36 = arith.mulf %34, %35 : vector<128x8xf32>
    %37 = arith.truncf %36 : vector<128x8xf32> to vector<128x8xbf16>
    %c127_i32_19 = arith.constant 127 : i32
    %38 = tpu.dynamic_rotate %33 by %c127_i32_19 dim 0 : vector<128x8xf32>, i32 -> vector<128x8xf32>
    %39 = vector.broadcast %1 : vector<128x1xf32> to vector<128x8xf32>
    %40 = arith.mulf %38, %39 : vector<128x8xf32>
    %41 = arith.truncf %40 : vector<128x8xf32> to vector<128x8xbf16>
    %42 = arith.truncf %33 : vector<128x8xf32> to vector<128x8xbf16>
    %c0_20 = arith.constant 0 : index
    %c0_21 = arith.constant 0 : index
    %43 = vector.load %arg6[%c0_20, %c0_21] : memref<8x16xbf16, #tpu.memory_space<vmem>>, vector<8x16xbf16>
    %cst_22 = arith.constant dense<0.000000e+00> : vector<128x16xf32>
    %44 = tpu.matmul %37, %43, %cst_22 {dimension_numbers = #tpu.dot_dimension_numbers<[1], [0], [0], [1], [0, 0, 1, 1], [], []>} : vector<128x8xbf16>, vector<8x16xbf16>, vector<128x16xf32> -> vector<128x16xf32>
    %c0_23 = arith.constant 0 : index
    %c0_24 = arith.constant 0 : index
    %45 = vector.load %arg7[%c0_23, %c0_24] : memref<8x16xbf16, #tpu.memory_space<vmem>>, vector<8x16xbf16>
    %cst_25 = arith.constant dense<0.000000e+00> : vector<128x16xf32>
    %46 = tpu.matmul %42, %45, %cst_25 {dimension_numbers = #tpu.dot_dimension_numbers<[1], [0], [0], [1], [0, 0, 1, 1], [], []>} : vector<128x8xbf16>, vector<8x16xbf16>, vector<128x16xf32> -> vector<128x16xf32>
    %47 = arith.addf %44, %46 : vector<128x16xf32>
    %c0_26 = arith.constant 0 : index
    %c0_27 = arith.constant 0 : index
    %48 = vector.load %arg8[%c0_26, %c0_27] : memref<8x16xbf16, #tpu.memory_space<vmem>>, vector<8x16xbf16>
    %cst_28 = arith.constant dense<0.000000e+00> : vector<128x16xf32>
    %49 = tpu.matmul %41, %48, %cst_28 {dimension_numbers = #tpu.dot_dimension_numbers<[1], [0], [0], [1], [0, 0, 1, 1], [], []>} : vector<128x8xbf16>, vector<8x16xbf16>, vector<128x16xf32> -> vector<128x16xf32>
    %50 = arith.addf %47, %49 : vector<128x16xf32>
    %c0_29 = arith.constant 0 : index
    %c0_30 = arith.constant 0 : index
    %51 = vector.load %arg9[%c0_29, %c0_30] : memref<1x16xf32, #tpu.memory_space<vmem>>, vector<1x16xf32>
    %52 = vector.broadcast %51 : vector<1x16xf32> to vector<128x16xf32>
    %53 = arith.addf %50, %52 : vector<128x16xf32>
    %54 = vector.extract_strided_slice %53 {offsets = [0, 0], sizes = [128, 8], strides = [1, 1]} : vector<128x16xf32> to vector<128x8xf32>
    %55 = arith.negf %54 : vector<128x8xf32>
    %56 = math.exp %55 : vector<128x8xf32>
    %cst_31 = arith.constant 1.000000e+00 : f32
    %57 = vector.broadcast %cst_31 : f32 to vector<128x8xf32>
    %58 = arith.addf %57, %56 : vector<128x8xf32>
    %59 = arith.divf %57, %58 : vector<128x8xf32>
    %60 = vector.extract_strided_slice %53 {offsets = [0, 8], sizes = [128, 8], strides = [1, 1]} : vector<128x16xf32> to vector<128x8xf32>
    %cst_32 = arith.constant 0.000000e+00 : f32
    %61 = vector.broadcast %cst_32 : f32 to vector<128x8xf32>
    %62 = arith.maximumf %60, %61 : vector<128x8xf32>
    %63 = arith.mulf %59, %62 : vector<128x8xf32>
    %c0_33 = arith.constant 0 : index
    %c0_34 = arith.constant 0 : index
    %64 = vector.load %arg10[%c0_33, %c0_34] : memref<128x8xf32, #tpu.memory_space<vmem>>, vector<128x8xf32>
    %65 = arith.mulf %63, %64 : vector<128x8xf32>
    %cst_35 = arith.constant dense<0.000000e+00> : vector<128xf32>
    %66 = vector.multi_reduction <add>, %65, %cst_35 [1] : vector<128x8xf32> to vector<128xf32>
    %67 = vector.shape_cast %66 : vector<128xf32> to vector<128x1xf32>
    %68 = vector.shape_cast %67 : vector<128x1xf32> to vector<8x16xf32>
    %cst_36 = arith.constant dense<0.000000e+00> : vector<8xf32>
    %69 = vector.multi_reduction <add>, %68, %cst_36 [1] : vector<8x16xf32> to vector<8xf32>
    %70 = vector.shape_cast %69 : vector<8xf32> to vector<8x1xf32>
    %c0_37 = arith.constant 0 : index
    %c0_38 = arith.constant 0 : index
    %71 = memref.load %arg13[%c0_37, %c0_38] : memref<1x1xf32, #tpu.memory_space<smem>>
    %72 = vector.broadcast %71 : f32 to vector<8x1xf32>
    %73 = arith.addf %70, %72 : vector<8x1xf32>
    %c0_39 = arith.constant 0 : index
    %c0_40 = arith.constant 0 : index
    %74 = vector.load %arg14[%c0_39, %c0_40] : memref<8x1xf32, #tpu.memory_space<vmem>>, vector<8x1xf32>
    tpu.vector_store %arg14[%c0_39, %c0_40], %73 {strides = array<i32>} : memref<8x1xf32, #tpu.memory_space<vmem>>, vector<8x1xf32>,
    return
  }
  func.func @transform_0(%arg0: i32) -> (i32, i32, i32) {
    %c0_i32 = arith.constant 0 : i32
    %c0_i32_0 = arith.constant 0 : i32
    %c0_i32_1 = arith.constant 0 : i32
    return %arg0, %c0_i32, %c0_i32_0 : i32, i32, i32
  }
  func.func @transform_1(%arg0: i32) -> (i32, i32) {
    %c0_i32 = arith.constant 0 : i32
    %c0_i32_0 = arith.constant 0 : i32
    %c0_i32_1 = arith.constant 0 : i32
    return %c0_i32, %c0_i32_0 : i32, i32
  }
  func.func @transform_2(%arg0: i32) -> (i32, i32) {
    %c0_i32 = arith.constant 0 : i32
    %c0_i32_0 = arith.constant 0 : i32
    %c0_i32_1 = arith.constant 0 : i32
    return %c0_i32, %c0_i32_0 : i32, i32
  }
  func.func @transform_3(%arg0: i32) -> (i32, i32) {
    %c0_i32 = arith.constant 0 : i32
    %c0_i32_0 = arith.constant 0 : i32
    %c0_i32_1 = arith.constant 0 : i32
    return %c0_i32, %c0_i32_0 : i32, i32
  }
  func.func @transform_4(%arg0: i32) -> (i32, i32) {
    %c0_i32 = arith.constant 0 : i32
    %c0_i32_0 = arith.constant 0 : i32
    %c0_i32_1 = arith.constant 0 : i32
    return %c0_i32, %c0_i32_0 : i32, i32
  }
  func.func @transform_5(%arg0: i32) -> (i32, i32) {
    %c0_i32 = arith.constant 0 : i32
    %c0_i32_0 = arith.constant 0 : i32
    %c0_i32_1 = arith.constant 0 : i32
    return %c0_i32, %c0_i32_0 : i32, i32
  }
  func.func @transform_6(%arg0: i32) -> (i32, i32) {
    %c0_i32 = arith.constant 0 : i32
    %c0_i32_0 = arith.constant 0 : i32
    %c0_i32_1 = arith.constant 0 : i32
    return %c0_i32, %c0_i32_0 : i32, i32
  }
  func.func @transform_7(%arg0: i32) -> (i32, i32) {
    %c0_i32 = arith.constant 0 : i32
    %c0_i32_0 = arith.constant 0 : i32
    %c0_i32_1 = arith.constant 0 : i32
    return %c0_i32, %c0_i32_0 : i32, i32
  }
  func.func @transform_8(%arg0: i32) -> (i32, i32) {
    %c0_i32 = arith.constant 0 : i32
    %c0_i32_0 = arith.constant 0 : i32
    %c0_i32_1 = arith.constant 0 : i32
    return %c0_i32, %c0_i32_0 : i32, i32
  }
  func.func @transform_9(%arg0: i32) -> (i32, i32) {
    %c0_i32 = arith.constant 0 : i32
    %c0_i32_0 = arith.constant 0 : i32
    %c0_i32_1 = arith.constant 0 : i32
    return %c0_i32, %c0_i32_0 : i32, i32
  }
  func.func @transform_10(%arg0: i32) -> (i32, i32) {
    %c0_i32 = arith.constant 0 : i32
    %c0_i32_0 = arith.constant 0 : i32
    %c0_i32_1 = arith.constant 0 : i32
    return %c0_i32, %c0_i32_0 : i32, i32
  }
  func.func @transform_11(%arg0: i32) -> (i32, i32) {
    %c0_i32 = arith.constant 0 : i32
    %c0_i32_0 = arith.constant 0 : i32
    %c0_i32_1 = arith.constant 0 : i32
    return %c0_i32, %c0_i32_0 : i32, i32
  }
  func.func @transform_12(%arg0: i32) -> (i32, i32) {
    %c0_i32 = arith.constant 0 : i32
    %c0_i32_0 = arith.constant 0 : i32
    %c0_i32_1 = arith.constant 0 : i32
    return %c0_i32, %c0_i32_0 : i32, i32
  }
  func.func @transform_13(%arg0: i32) -> (i32, i32) {
    %c0_i32 = arith.constant 0 : i32
    %c0_i32_0 = arith.constant 0 : i32
    return %arg0, %c0_i32 : i32, i32
  }
}

</mosaic_0001>

<llo_original>
// kernel: brain_forward_pallas.1
$region0: #{brain_forward_pallas.1}
  #allocation0 [shape = 'u32[]', space=smem, size = 0x4, offset = 0x4, fixed_abs, tag = 'smem constant byte address 0x4 - core index']
  #allocation1 [shape = 'u32[144,128]{1,0:T(1,128)}', space=vmem, size = 0x12000, scoped, tag = 'internal scratch']
  #allocation2 [shape = 'f32[1,1]{1,0:T(1,128)S(6)}', space=smem, size = 0x200, scoped, tag = 'scoped memory for brain_forward_pallas.1']
  %s0 = inlined_call_operand.vmem [shape: f32[16,16,4], index: 0, kind: input, shape index: {}]
  %s1 = inlined_call_operand.vmem [shape: bf16[4,16], index: 1, kind: input, shape index: {}]
  %s2 = inlined_call_operand.vmem [shape: bf16[4,16], index: 2, kind: input, shape index: {}]
  %s3 = inlined_call_operand.vmem [shape: bf16[4,16], index: 3, kind: input, shape index: {}]
  %s4 = inlined_call_operand.vmem [shape: f32[1,16], index: 4, kind: input, shape index: {}]
  %s5 = inlined_call_operand.vmem [shape: bf16[8,16], index: 5, kind: input, shape index: {}]
  %s6 = inlined_call_operand.vmem [shape: bf16[8,16], index: 6, kind: input, shape index: {}]
  %s7 = inlined_call_operand.vmem [shape: bf16[8,16], index: 7, kind: input, shape index: {}]
  %s8 = inlined_call_operand.vmem [shape: f32[1,16], index: 8, kind: input, shape index: {}]
  %s9 = inlined_call_operand.vmem [shape: f32[128,8], index: 9, kind: input, shape index: {}]
  %s10 = inlined_call_operand.vmem [shape: f32[128,1], index: 10, kind: input, shape index: {}]
  %s11 = inlined_call_operand.vmem [shape: f32[128,1], index: 11, kind: input, shape index: {}]
  %s12 = inlined_call_operand.<no memory space> [shape: f32[1,1], index: 12, kind: input, shape index: {}]
  %s13 = inlined_call_operand.vmem [shape: f32[16,1], index: 13, kind: output, shape index: {}]
  %s14 = sld [smem:[#allocation0]]
  $region85: #{brain_forward_pallas.1} parent=0
    _
  %s16 = ssub.s32 1, %s14
  %s17 = scalar_select 0, %s16, %s14
  %18 = sst [smem:[#allocation2]] %s12
  loop: start=0, step=1, limit=4
  $region2: #{brain_forward_pallas.1} parent=0 // loop_pre_header
    _
  $region3: #{brain_forward_pallas.1} parent=0 // loop_header
    %s20 = sphi 0, %s24
    %p21 = scmp.ge.s32.totalorder %s20, 4
    %s30 = sphi 0, %s32
    %s33 = sphi 0, %s30
    %s34 = sphi 0, %s33
    %s50 = sphi 0, %s34
    %s54 = sphi 0, %s54
    %s56 = sphi 0, %s54
    %s57 = sphi 0, %s56
    %s71 = sphi 0, %s57
    %s75 = sphi 0, %s75
    %s77 = sphi 0, %s75
    %s78 = sphi 0, %s77
    %s92 = sphi 0, %s78
    %s96 = sphi 0, %s96
    %s98 = sphi 0, %s96
    %s99 = sphi 0, %s98
    %s113 = sphi 0, %s99
    %s117 = sphi 0, %s117
    %s119 = sphi 0, %s117
    %s120 = sphi 0, %s119
    %s134 = sphi 0, %s120
    %s138 = sphi 0, %s138
    %s140 = sphi 0, %s138
    %s141 = sphi 0, %s140
    %s155 = sphi 0, %s141
    %s159 = sphi 0, %s159
    %s161 = sphi 0, %s159
    %s162 = sphi 0, %s161
    %s176 = sphi 0, %s162
    %s180 = sphi 0, %s180
    %s182 = sphi 0, %s180
    %s183 = sphi 0, %s182
    %s197 = sphi 0, %s183
    %s201 = sphi 0, %s201
    %s203 = sphi 0, %s201
    %s204 = sphi 0, %s203
    %s218 = sphi 0, %s204
    %s222 = sphi 0, %s222
    %s224 = sphi 0, %s222
    %s225 = sphi 0, %s224
    %s239 = sphi 0, %s225
    %s243 = sphi 0, %s243
    %s245 = sphi 0, %s243
    %s246 = sphi 0, %s245
    %s260 = sphi 0, %s246
    %s264 = sphi 0, %s264
    %s266 = sphi 0, %s264
    %s267 = sphi 0, %s266
    %s281 = sphi 0, %s267
    %s285 = sphi 0, %s285
    %s287 = sphi 0, %s285
    %s288 = sphi 0, %s287
    %s302 = sphi 0, %s288
    %s308 = sphi 0, %s310
    %s311 = sphi 0, %s308
    %s312 = sphi 0, %s311
    %s328 = sphi 0, %s312
  $region4: #{brain_forward_pallas.1} parent=0 // loop_header_branch
    %23 = sbr.rel (%p21) target = $region8
  $region5: #{brain_forward_pallas.1} parent=0 // loop_body
    %s25 = ssub.s32 %s20, 1
    %s26 = ssub.s32 %s20, 2
    %s27 = sadd.s32 %s20, 1
    %s28 = ssub.s32 %s20, %s27
    %p29 = scmp.eq.s32.totalorder %s28, 0
    %s31 = sadd.s32 %s30, 1
    %s32 = scalar_select %p29, %s30, %s31
    %p35 = pneg %p29
    %p36 = scmp.eq.s32.totalorder %s20, 1
    %p37 = por %p35, %p36
    %p38 = scmp.ne.s32.totalorder %s30, %s33
    %p39 = scmp.eq.s32.totalorder %s20, 0
    %p40 = por %p38, %p39
    %p41 = scmp.ne.s32.totalorder %s30, %s33
    %p42 = scmp.eq.s32.totalorder %s25, 1
    %p43 = por %p41, %p42
    %p44 = scmp.ne.s32.totalorder %s33, %s34
    %p45 = scmp.eq.s32.totalorder %s25, 0
    %p46 = por %p44, %p45
    %p47 = scmp.ne.s32.totalorder %s33, %s34
    %p48 = scmp.eq.s32.totalorder %s26, 1
    %p49 = por %p47, %p48
    %p51 = scmp.ne.s32.totalorder %s34, %s50
    %p52 = scmp.eq.s32.totalorder %s26, 0
    %p53 = por %p51, %p52
    %s55 = sadd.s32 %s54, 1
    %p58 = scmp.eq.s32.totalorder %s20, 1
    %p59 = scmp.ne.s32.totalorder %s54, %s56
    %p60 = scmp.eq.s32.totalorder %s20, 0
    %p61 = por %p59, %p60
    %p62 = scmp.ne.s32.totalorder %s54, %s56
    %p63 = scmp.eq.s32.totalorder %s25, 1
    %p64 = por %p62, %p63
    %p65 = scmp.ne.s32.totalorder %s56, %s57
    %p66 = scmp.eq.s32.totalorder %s25, 0
    %p67 = por %p65, %p66
    %p68 = scmp.ne.s32.totalorder %s56, %s57
    %p69 = scmp.eq.s32.totalorder %s26, 1
    %p70 = por %p68, %p69
    %p72 = scmp.ne.s32.totalorder %s57, %s71
    %p73 = scmp.eq.s32.totalorder %s26, 0
    %p74 = por %p72, %p73
    %s76 = sadd.s32 %s75, 1
    %p79 = scmp.eq.s32.totalorder %s20, 1
    %p80 = scmp.ne.s32.totalorder %s75, %s77
    %p81 = scmp.eq.s32.totalorder %s20, 0
    %p82 = por %p80, %p81
    %p83 = scmp.ne.s32.totalorder %s75, %s77
    %p84 = scmp.eq.s32.totalorder %s25, 1
    %p85 = por %p83, %p84
    %p86 = scmp.ne.s32.totalorder %s77, %s78
    %p87 = scmp.eq.s32.totalorder %s25, 0
    %p88 = por %p86, %p87
    %p89 = scmp.ne.s32.totalorder %s77, %s78
    %p90 = scmp.eq.s32.totalorder %s26, 1
    %p91 = por %p89, %p90
    %p93 = scmp.ne.s32.totalorder %s78, %s92
    %p94 = scmp.eq.s32.totalorder %s26, 0
    %p95 = por %p93, %p94
    %s97 = sadd.s32 %s96, 1
    %p100 = scmp.eq.s32.totalorder %s20, 1
    %p101 = scmp.ne.s32.totalorder %s96, %s98
    %p102 = scmp.eq.s32.totalorder %s20, 0
    %p103 = por %p101, %p102
    %p104 = scmp.ne.s32.totalorder %s96, %s98
    %p105 = scmp.eq.s32.totalorder %s25, 1
    %p106 = por %p104, %p105
    %p107 = scmp.ne.s32.totalorder %s98, %s99
    %p108 = scmp.eq.s32.totalorder %s25, 0
    %p109 = por %p107, %p108
    %p110 = scmp.ne.s32.totalorder %s98, %s99
    %p111 = scmp.eq.s32.totalorder %s26, 1
    %p112 = por %p110, %p111
    %p114 = scmp.ne.s32.totalorder %s99, %s113
    %p115 = scmp.eq.s32.totalorder %s26, 0
    %p116 = por %p114, %p115
    %s118 = sadd.s32 %s117, 1
    %p121 = scmp.eq.s32.totalorder %s20, 1
    %p122 = scmp.ne.s32.totalorder %s117, %s119
    %p123 = scmp.eq.s32.totalorder %s20, 0
    %p124 = por %p122, %p123
    %p125 = scmp.ne.s32.totalorder %s117, %s119
    %p126 = scmp.eq.s32.totalorder %s25, 1
    %p127 = por %p125, %p126
    %p128 = scmp.ne.s32.totalorder %s119, %s120
    %p129 = scmp.eq.s32.totalorder %s25, 0
    %p130 = por %p128, %p129
    %p131 = scmp.ne.s32.totalorder %s119, %s120
    %p132 = scmp.eq.s32.totalorder %s26, 1
    %p133 = por %p131, %p132
    %p135 = scmp.ne.s32.totalorder %s120, %s134
    %p136 = scmp.eq.s32.totalorder %s26, 0
    %p137 = por %p135, %p136
    %s139 = sadd.s32 %s138, 1
    %p142 = scmp.eq.s32.totalorder %s20, 1
    %p143 = scmp.ne.s32.totalorder %s138, %s140
    %p144 = scmp.eq.s32.totalorder %s20, 0
    %p145 = por %p143, %p144
    %p146 = scmp.ne.s32.totalorder %s138, %s140
    %p147 = scmp.eq.s32.totalorder %s25, 1
    %p148 = por %p146, %p147
    %p149 = scmp.ne.s32.totalorder %s140, %s141
    %p150 = scmp.eq.s32.totalorder %s25, 0
    %p151 = por %p149, %p150
    %p152 = scmp.ne.s32.totalorder %s140, %s141
    %p153 = scmp.eq.s32.totalorder %s26, 1
    %p154 = por %p152, %p153
    %p156 = scmp.ne.s32.totalorder %s141, %s155
    %p157 = scmp.eq.s32.totalorder %s26, 0
    %p158 = por %p156, %p157
    %s160 = sadd.s32 %s159, 1
    %p163 = scmp.eq.s32.totalorder %s20, 1
    %p164 = scmp.ne.s32.totalorder %s159, %s161
    %p165 = scmp.eq.s32.totalorder %s20, 0
    %p166 = por %p164, %p165
    %p167 = scmp.ne.s32.totalorder %s159, %s161
    %p168 = scmp.eq.s32.totalorder %s25, 1
    %p169 = por %p167, %p168
    %p170 = scmp.ne.s32.totalorder %s161, %s162
    %p171 = scmp.eq.s32.totalorder %s25, 0
    %p172 = por %p170, %p171
    %p173 = scmp.ne.s32.totalorder %s161, %s162
    %p174 = scmp.eq.s32.totalorder %s26, 1
    %p175 = por %p173, %p174
    %p177 = scmp.ne.s32.totalorder %s162, %s176
    %p178 = scmp.eq.s32.totalorder %s26, 0
    %p179 = por %p177, %p178
    %s181 = sadd.s32 %s180, 1
    %p184 = scmp.eq.s32.totalorder %s20, 1
    %p185 = scmp.ne.s32.totalorder %s180, %s182
    %p186 = scmp.eq.s32.totalorder %s20, 0
    %p187 = por %p185, %p186
    %p188 = scmp.ne.s32.totalorder %s180, %s182
    %p189 = scmp.eq.s32.totalorder %s25, 1
    %p190 = por %p188, %p189
    %p191 = scmp.ne.s32.totalorder %s182, %s183
    %p192 = scmp.eq.s32.totalorder %s25, 0
    %p193 = por %p191, %p192
    %p194 = scmp.ne.s32.totalorder %s182, %s183
    %p195 = scmp.eq.s32.totalorder %s26, 1
    %p196 = por %p194, %p195
    %p198 = scmp.ne.s32.totalorder %s183, %s197
    %p199 = scmp.eq.s32.totalorder %s26, 0
    %p200 = por %p198, %p199
    %s202 = sadd.s32 %s201, 1
    %p205 = scmp.eq.s32.totalorder %s20, 1
    %p206 = scmp.ne.s32.totalorder %s201, %s203
    %p207 = scmp.eq.s32.totalorder %s20, 0
    %p208 = por %p206, %p207
    %p209 = scmp.ne.s32.totalorder %s201, %s203
    %p210 = scmp.eq.s32.totalorder %s25, 1
    %p211 = por %p209, %p210
    %p212 = scmp.ne.s32.totalorder %s203, %s204
    %p213 = scmp.eq.s32.totalorder %s25, 0
    %p214 = por %p212, %p213
    %p215 = scmp.ne.s32.totalorder %s203, %s204
    %p216 = scmp.eq.s32.totalorder %s26, 1
    %p217 = por %p215, %p216
    %p219 = scmp.ne.s32.totalorder %s204, %s218
    %p220 = scmp.eq.s32.totalorder %s26, 0
    %p221 = por %p219, %p220
    %s223 = sadd.s32 %s222, 1
    %p226 = scmp.eq.s32.totalorder %s20, 1
    %p227 = scmp.ne.s32.totalorder %s222, %s224
    %p228 = scmp.eq.s32.totalorder %s20, 0
    %p229 = por %p227, %p228
    %p230 = scmp.ne.s32.totalorder %s222, %s224
    %p231 = scmp.eq.s32.totalorder %s25, 1
    %p232 = por %p230, %p231
    %p233 = scmp.ne.s32.totalorder %s224, %s225
    %p234 = scmp.eq.s32.totalorder %s25, 0
    %p235 = por %p233, %p234
    %p236 = scmp.ne.s32.totalorder %s224, %s225
    %p237 = scmp.eq.s32.totalorder %s26, 1
    %p238 = por %p236, %p237
    %p240 = scmp.ne.s32.totalorder %s225, %s239
    %p241 = scmp.eq.s32.totalorder %s26, 0
    %p242 = por %p240, %p241
    %s244 = sadd.s32 %s243, 1
    %p247 = scmp.eq.s32.totalorder %s20, 1
    %p248 = scmp.ne.s32.totalorder %s243, %s245
    %p249 = scmp.eq.s32.totalorder %s20, 0
    %p250 = por %p248, %p249
    %p251 = scmp.ne.s32.totalorder %s243, %s245
    %p252 = scmp.eq.s32.totalorder %s25, 1
    %p253 = por %p251, %p252
    %p254 = scmp.ne.s32.totalorder %s245, %s246
    %p255 = scmp.eq.s32.totalorder %s25, 0
    %p256 = por %p254, %p255
    %p257 = scmp.ne.s32.totalorder %s245, %s246
    %p258 = scmp.eq.s32.totalorder %s26, 1
    %p259 = por %p257, %p258
    %p261 = scmp.ne.s32.totalorder %s246, %s260
    %p262 = scmp.eq.s32.totalorder %s26, 0
    %p263 = por %p261, %p262
    %s265 = sadd.s32 %s264, 1
    %p268 = scmp.eq.s32.totalorder %s20, 1
    %p269 = scmp.ne.s32.totalorder %s264, %s266
    %p270 = scmp.eq.s32.totalorder %s20, 0
    %p271 = por %p269, %p270
    %p272 = scmp.ne.s32.totalorder %s264, %s266
    %p273 = scmp.eq.s32.totalorder %s25, 1
    %p274 = por %p272, %p273
    %p275 = scmp.ne.s32.totalorder %s266, %s267
    %p276 = scmp.eq.s32.totalorder %s25, 0
    %p277 = por %p275, %p276
    %p278 = scmp.ne.s32.totalorder %s266, %s267
    %p279 = scmp.eq.s32.totalorder %s26, 1
    %p280 = por %p278, %p279
    %p282 = scmp.ne.s32.totalorder %s267, %s281
    %p283 = scmp.eq.s32.totalorder %s26, 0
    %p284 = por %p282, %p283
    %s286 = sadd.s32 %s285, 1
    %p289 = scmp.eq.s32.totalorder %s20, 1
    %p290 = scmp.ne.s32.totalorder %s285, %s287
    %p291 = scmp.eq.s32.totalorder %s20, 0
    %p292 = por %p290, %p291
    %p293 = scmp.ne.s32.totalorder %s285, %s287
    %p294 = scmp.eq.s32.totalorder %s25, 1
    %p295 = por %p293, %p294
    %p296 = scmp.ne.s32.totalorder %s287, %s288
    %p297 = scmp.eq.s32.totalorder %s25, 0
    %p298 = por %p296, %p297
    %p299 = scmp.ne.s32.totalorder %s287, %s288
    %p300 = scmp.eq.s32.totalorder %s26, 1
    %p301 = por %p299, %p300
    %p303 = scmp.ne.s32.totalorder %s288, %s302
    %p304 = scmp.eq.s32.totalorder %s26, 0
    %p305 = por %p303, %p304
    %s306 = ssub.s32 %s20, %s27
    %p307 = scmp.eq.s32.totalorder %s306, 0
    %s309 = sadd.s32 %s308, 1
    %s310 = scalar_select %p307, %s308, %s309
    %p313 = pneg %p307
    %p314 = scmp.eq.s32.totalorder %s20, 1
    %p315 = por %p313, %p314
    %p316 = scmp.ne.s32.totalorder %s308, %s311
    %p317 = scmp.eq.s32.totalorder %s20, 0
    %p318 = por %p316, %p317
    %p319 = scmp.ne.s32.totalorder %s308, %s311
    %p320 = scmp.eq.s32.totalorder %s25, 1
    %p321 = por %p319, %p320
    %p322 = scmp.ne.s32.totalorder %s311, %s312
    %p323 = scmp.eq.s32.totalorder %s25, 0
    %p324 = por %p322, %p323
    %p325 = scmp.ne.s32.totalorder %s311, %s312
    %p326 = scmp.eq.s32.totalorder %s26, 1
    %p327 = por %p325, %p326
    %p329 = scmp.ne.s32.totalorder %s312, %s328
    %p330 = scmp.eq.s32.totalorder %s26, 0
    %p331 = por %p329, %p330
    %p332 = scmp.le.s32.totalorder 1, %s20
    %p333 = scmp.lt.s32.totalorder %s20, 3
    %p334 = pnand %p332, %p333
    %p335 = pneg %p334
    // Predicated region
    $region9: #{brain_forward_pallas.1} parent=5 // pred_check
      _
    $region10: #{brain_forward_pallas.1} parent=5 // pred_check_branch
      %337 = sbr.rel (%p334) target = $region12
    $region11: #{brain_forward_pallas.1} parent=5 // pred_region
      %s338 = ssub.s32 %s20, 1
      // Predicated region
      $region13: #{brain_forward_pallas.1} parent=11 // pred_check
        %p339 = pneg %p67
      $region14: #{brain_forward_pallas.1} parent=11 // pred_check_branch
        %341 = sbr.rel (%p339) target = $region16
      $region15: #{brain_forward_pallas.1} parent=11 // pred_region
        _
      $region16: #{brain_forward_pallas.1} parent=11 // pred_fallthru
        _
      // Predicated region
      $region17: #{brain_forward_pallas.1} parent=11 // pred_check
        %p342 = pneg %p88
      $region18: #{brain_forward_pallas.1} parent=11 // pred_check_branch
        %344 = sbr.rel (%p342) target = $region20
      $region19: #{brain_forward_pallas.1} parent=11 // pred_region
        _
      $region20: #{brain_forward_pallas.1} parent=11 // pred_fallthru
        _
      // Predicated region
      $region21: #{brain_forward_pallas.1} parent=11 // pred_check
        %p345 = pneg %p109
      $region22: #{brain_forward_pallas.1} parent=11 // pred_check_branch
        %347 = sbr.rel (%p345) target = $region24
      $region23: #{brain_forward_pallas.1} parent=11 // pred_region
        _
      $region24: #{brain_forward_pallas.1} parent=11 // pred_fallthru
        _
      // Predicated region
      $region25: #{brain_forward_pallas.1} parent=11 // pred_check
        %p348 = pneg %p130
      $region26: #{brain_forward_pallas.1} parent=11 // pred_check_branch
        %350 = sbr.rel (%p348) target = $region28
      $region27: #{brain_forward_pallas.1} parent=11 // pred_region
        _
      $region28: #{brain_forward_pallas.1} parent=11 // pred_fallthru
        _
      // Predicated region
      $region29: #{brain_forward_pallas.1} parent=11 // pred_check
        %p351 = pneg %p151
      $region30: #{brain_forward_pallas.1} parent=11 // pred_check_branch
        %353 = sbr.rel (%p351) target = $region32
      $region31: #{brain_forward_pallas.1} parent=11 // pred_region
        _
      $region32: #{brain_forward_pallas.1} parent=11 // pred_fallthru
        _
      // Predicated region
      $region33: #{brain_forward_pallas.1} parent=11 // pred_check
        %p354 = pneg %p172
      $region34: #{brain_forward_pallas.1} parent=11 // pred_check_branch
        %356 = sbr.rel (%p354) target = $region36
      $region35: #{brain_forward_pallas.1} parent=11 // pred_region
        _
      $region36: #{brain_forward_pallas.1} parent=11 // pred_fallthru
        _
      // Predicated region
      $region37: #{brain_forward_pallas.1} parent=11 // pred_check
        %p357 = pneg %p193
      $region38: #{brain_forward_pallas.1} parent=11 // pred_check_branch
        %359 = sbr.rel (%p357) target = $region40
      $region39: #{brain_forward_pallas.1} parent=11 // pred_region
        _
      $region40: #{brain_forward_pallas.1} parent=11 // pred_fallthru
        _
      // Predicated region
      $region41: #{brain_forward_pallas.1} parent=11 // pred_check
        %p360 = pneg %p214
      $region42: #{brain_forward_pallas.1} parent=11 // pred_check_branch
        %362 = sbr.rel (%p360) target = $region44
      $region43: #{brain_forward_pallas.1} parent=11 // pred_region
        _
      $region44: #{brain_forward_pallas.1} parent=11 // pred_fallthru
        _
      // Predicated region
      $region45: #{brain_forward_pallas.1} parent=11 // pred_check
        %p363 = pneg %p235
      $region46: #{brain_forward_pallas.1} parent=11 // pred_check_branch
        %365 = sbr.rel (%p363) target = $region48
      $region47: #{brain_forward_pallas.1} parent=11 // pred_region
        _
      $region48: #{brain_forward_pallas.1} parent=11 // pred_fallthru
        _
      // Predicated region
      $region49: #{brain_forward_pallas.1} parent=11 // pred_check
        %p366 = pneg %p256
      $region50: #{brain_forward_pallas.1} parent=11 // pred_check_branch
        %368 = sbr.rel (%p366) target = $region52
      $region51: #{brain_forward_pallas.1} parent=11 // pred_region
        _
      $region52: #{brain_forward_pallas.1} parent=11 // pred_fallthru
        _
      // Predicated region
      $region53: #{brain_forward_pallas.1} parent=11 // pred_check
        %p369 = pneg %p277
      $region54: #{brain_forward_pallas.1} parent=11 // pred_check_branch
        %371 = sbr.rel (%p369) target = $region56
      $region55: #{brain_forward_pallas.1} parent=11 // pred_region
        _
      $region56: #{brain_forward_pallas.1} parent=11 // pred_fallthru
        _
      // Predicated region
      $region57: #{brain_forward_pallas.1} parent=11 // pred_check
        %p372 = pneg %p298
      $region58: #{brain_forward_pallas.1} parent=11 // pred_check_branch
        %374 = sbr.rel (%p372) target = $region60
      $region59: #{brain_forward_pallas.1} parent=11 // pred_region
        _
      $region60: #{brain_forward_pallas.1} parent=11 // pred_fallthru
        _
    $region12: #{brain_forward_pallas.1} parent=5 // pred_fallthru
      _
    %p375 = scmp.lt.s32.totalorder %s20, 2
    // Predicated region
    $region61: #{brain_forward_pallas.1} parent=5 // pred_check
      %p376 = pneg %p375
    $region62: #{brain_forward_pallas.1} parent=5 // pred_check_branch
      %378 = sbr.rel (%p376) target = $region64
    $region63: #{brain_forward_pallas.1} parent=5 // pred_region
      // Predicated region
      $region65: #{brain_forward_pallas.1} parent=63 // pred_check
        %p379 = pneg %p40
      $region66: #{brain_forward_pallas.1} parent=63 // pred_check_branch
        %381 = sbr.rel (%p379) target = $region68
      $region67: #{brain_forward_pallas.1} parent=63 // pred_region
        %s382 = smul.u32 8, %s20
        %p383 = scmp.lt.s32.totalorder %s382, 15
        %s384 = scalar_select %p383, %s382, 15
        %s385 = smul.addr %s384, 2
        %s386 = smul.addr %s385, 8
        %s387 = scalar_lea.vmem %s0, %s386
        %s388 = smul.u32 8, %s20
      $region68: #{brain_forward_pallas.1} parent=63 // pred_fallthru
        _
    $region64: #{brain_forward_pallas.1} parent=5 // pred_fallthru
      _
    %p389 = scmp.le.s32.totalorder 1, %s20
    %p390 = scmp.lt.s32.totalorder %s20, 3
    %p391 = pnand %p389, %p390
    %p392 = pneg %p391
    // Predicated region
    $region69: #{brain_forward_pallas.1} parent=5 // pred_check
      _
    $region70: #{brain_forward_pallas.1} parent=5 // pred_check_branch
      %394 = sbr.rel (%p391) target = $region72
    $region71: #{brain_forward_pallas.1} parent=5 // pred_region
      %s395 = ssub.s32 %s20, 1
      %s396 = smul.u32 8, %s25
      %p397 = scmp.lt.s32.totalorder %s396, 15
      %s398 = scalar_select %p397, %s396, 15
      %s399 = smul.addr %s398, 2
      %s400 = smul.addr %s399, 8
      %s401 = scalar_lea.vmem %s0, %s400
      %p402 = pneg %p46
      %p403 = pneg %p43
      %p404 = pneg %p67
      %p405 = pneg %p64
      %p406 = pneg %p88
      %p407 = pneg %p85
      %p408 = pneg %p109
      %p409 = pneg %p106
      %p410 = pneg %p130
      %p411 = pneg %p127
      %p412 = pneg %p151
      %p413 = pneg %p148
      %p414 = pneg %p172
      %p415 = pneg %p169
      %p416 = pneg %p193
      %p417 = pneg %p190
      %p418 = pneg %p214
      %p419 = pneg %p211
      %p420 = pneg %p235
      %p421 = pneg %p232
      %p422 = pneg %p256
      %p423 = pneg %p253
      %p424 = pneg %p277
      %p425 = pneg %p274
      %p426 = pneg %p298
      %p427 = pneg %p295
      %p428 = pneg %p324
      %p429 = pneg %p321
      %p430 = scmp.lt.s32.totalorder %s25, 1
      %s431 = scalar_select %p430, %s25, 1
      %s432 = smul.addr %s431, 8
      %s433 = scalar_lea.vmem %s13, %s432
      %s434 = smul.u32 8, %s25
      %p435 = scmp.lt.s32.totalorder %s434, 15
      %s436 = scalar_select %p435, %s434, 15
      %s437 = smul.addr %s436, 2
      %s438 = smul.addr %s437, 8
      %s439 = scalar_lea.vmem %s0, %s438
      %s440 = smul.u32 8, %s25
      %p441 = scmp.lt.s32.totalorder %s25, 1
      %s442 = scalar_select %p441, %s25, 1
      %s443 = smul.addr %s442, 8
      %s444 = scalar_lea.vmem %s13, %s443
      %v446 = vld [vmem:[%s10] sm:$0xff]
      %v447 = vld [vmem:[%s10 + $0x8] sm:$0xff]
      %v448 = vld [vmem:[%s10 + $0x10] sm:$0xff]
      %v449 = vld [vmem:[%s10 + $0x18] sm:$0xff]
      %v450 = vld [vmem:[%s10 + $0x20] sm:$0xff]
      %v451 = vld [vmem:[%s10 + $0x28] sm:$0xff]
      %v452 = vld [vmem:[%s10 + $0x30] sm:$0xff]
      %v453 = vld [vmem:[%s10 + $0x38] sm:$0xff]
      %v454 = vld [vmem:[%s10 + $0x40] sm:$0xff]
      %v455 = vld [vmem:[%s10 + $0x48] sm:$0xff]
      %v456 = vld [vmem:[%s10 + $0x50] sm:$0xff]
      %v457 = vld [vmem:[%s10 + $0x58] sm:$0xff]
      %v458 = vld [vmem:[%s10 + $0x60] sm:$0xff]
      %v459 = vld [vmem:[%s10 + $0x68] sm:$0xff]
      %v460 = vld [vmem:[%s10 + $0x70] sm:$0xff]
      %v461 = vld [vmem:[%s10 + $0x78] sm:$0xff]
      %v462 = vld [vmem:[%s11] sm:$0xff]
      %v463 = vld [vmem:[%s11 + $0x8] sm:$0xff]
      %v464 = vld [vmem:[%s11 + $0x10] sm:$0xff]
      %v465 = vld [vmem:[%s11 + $0x18] sm:$0xff]
      %v466 = vld [vmem:[%s11 + $0x20] sm:$0xff]
      %v467 = vld [vmem:[%s11 + $0x28] sm:$0xff]
      %v468 = vld [vmem:[%s11 + $0x30] sm:$0xff]
      %v469 = vld [vmem:[%s11 + $0x38] sm:$0xff]
      %v470 = vld [vmem:[%s11 + $0x40] sm:$0xff]
      %v471 = vld [vmem:[%s11 + $0x48] sm:$0xff]
      %v472 = vld [vmem:[%s11 + $0x50] sm:$0xff]
      %v473 = vld [vmem:[%s11 + $0x58] sm:$0xff]
      %v474 = vld [vmem:[%s11 + $0x60] sm:$0xff]
      %v475 = vld [vmem:[%s11 + $0x68] sm:$0xff]
      %v476 = vld [vmem:[%s11 + $0x70] sm:$0xff]
      %v477 = vld [vmem:[%s11 + $0x78] sm:$0xff]
      %v478 = vld [vmem:[%s439] sm:$0xff]
      %v479 = vld [vmem:[%s439 + $0x8] sm:$0xff]
      %v480 = vld [vmem:[%s439 + $0x10] sm:$0xff]
      %v481 = vld [vmem:[%s439 + $0x18] sm:$0xff]
      %v482 = vld [vmem:[%s439 + $0x20] sm:$0xff]
      %v483 = vld [vmem:[%s439 + $0x28] sm:$0xff]
      %v484 = vld [vmem:[%s439 + $0x30] sm:$0xff]
      %v485 = vld [vmem:[%s439 + $0x38] sm:$0xff]
      %v486 = vld [vmem:[%s439 + $0x40] sm:$0xff]
      %v487 = vld [vmem:[%s439 + $0x48] sm:$0xff]
      %v488 = vld [vmem:[%s439 + $0x50] sm:$0xff]
      %v489 = vld [vmem:[%s439 + $0x58] sm:$0xff]
      %v490 = vld [vmem:[%s439 + $0x60] sm:$0xff]
      %v491 = vld [vmem:[%s439 + $0x68] sm:$0xff]
      %v492 = vld [vmem:[%s439 + $0x70] sm:$0xff]
      %v493 = vld [vmem:[%s439 + $0x78] sm:$0xff]
      %v494 = vrot.slane %v478, 7
      %v495 = vrot.slane %v479, 7
      %v496 = vrot.slane %v480, 7
      %v497 = vrot.slane %v481, 7
      %v498 = vrot.slane %v482, 7
      %v499 = vrot.slane %v483, 7
      %v500 = vrot.slane %v484, 7
      %v501 = vrot.slane %v485, 7
      %v502 = vrot.slane %v486, 7
      %v503 = vrot.slane %v487, 7
      %v504 = vrot.slane %v488, 7
      %v505 = vrot.slane %v489, 7
      %v506 = vrot.slane %v490, 7
      %v507 = vrot.slane %v491, 7
      %v508 = vrot.slane %v492, 7
      %v509 = vrot.slane %v493, 7
      %v510 = vlaneseq
      %v511 = vshrl.u32 %v510, 7
      %vm512 = vcmp.lt.s32.totalorder %v511, 1
      %v513 = vsel %vm512, %v508, %v509
      %v514 = vsel %vm512, %v507, %v508
      %v515 = vsel %vm512, %v506, %v507
      %v516 = vsel %vm512, %v505, %v506
      %v517 = vsel %vm512, %v504, %v505
      %v518 = vsel %vm512, %v503, %v504
      %v519 = vsel %vm512, %v502, %v503
      %v520 = vsel %vm512, %v501, %v502
      %v521 = vsel %vm512, %v500, %v501
      %v522 = vsel %vm512, %v499, %v500
      %v523 = vsel %vm512, %v498, %v499
      %v524 = vsel %vm512, %v497, %v498
      %v525 = vsel %vm512, %v496, %v497
      %v526 = vsel %vm512, %v495, %v496
      %v527 = vsel %vm512, %v494, %v495
      %v528 = vsel %vm512, %v509, %v494
      %530 = vset.pattern.permute.xlu0 0
      %531 = vperm.xlu0 %530, %v446
      %v532 = vpop.permute.xlu0 %531
      %535 = vset.pattern.permute.xlu0 0
      %536 = vperm.xlu0 %535, %v447
      %v537 = vpop.permute.xlu0 %536
      %540 = vset.pattern.permute.xlu0 0
      %541 = vperm.xlu0 %540, %v448
      %v542 = vpop.permute.xlu0 %541
      %545 = vset.pattern.permute.xlu0 0
      %546 = vperm.xlu0 %545, %v449
      %v547 = vpop.permute.xlu0 %546
      %550 = vset.pattern.permute.xlu0 0
      %551 = vperm.xlu0 %550, %v450
      %v552 = vpop.permute.xlu0 %551
      %555 = vset.pattern.permute.xlu0 0
      %556 = vperm.xlu0 %555, %v451
      %v557 = vpop.permute.xlu0 %556
      %560 = vset.pattern.permute.xlu0 0
      %561 = vperm.xlu0 %560, %v452
      %v562 = vpop.permute.xlu0 %561
      %565 = vset.pattern.permute.xlu0 0
      %566 = vperm.xlu0 %565, %v453
      %v567 = vpop.permute.xlu0 %566
      %570 = vset.pattern.permute.xlu0 0
      %571 = vperm.xlu0 %570, %v454
      %v572 = vpop.permute.xlu0 %571
      %575 = vset.pattern.permute.xlu0 0
      %576 = vperm.xlu0 %575, %v455
      %v577 = vpop.permute.xlu0 %576
      %580 = vset.pattern.permute.xlu0 0
      %581 = vperm.xlu0 %580, %v456
      %v582 = vpop.permute.xlu0 %581
      %585 = vset.pattern.permute.xlu0 0
      %586 = vperm.xlu0 %585, %v457
      %v587 = vpop.permute.xlu0 %586
      %590 = vset.pattern.permute.xlu0 0
      %591 = vperm.xlu0 %590, %v458
      %v592 = vpop.permute.xlu0 %591
      %595 = vset.pattern.permute.xlu0 0
      %596 = vperm.xlu0 %595, %v459
      %v597 = vpop.permute.xlu0 %596
      %600 = vset.pattern.permute.xlu0 0
      %601 = vperm.xlu0 %600, %v460
      %v602 = vpop.permute.xlu0 %601
      %605 = vset.pattern.permute.xlu0 0
      %606 = vperm.xlu0 %605, %v461
      %v607 = vpop.permute.xlu0 %606
      %v609 = vmul.f32 %v528, %v532
      %v610 = vmul.f32 %v527, %v537
      %v611 = vmul.f32 %v526, %v542
      %v612 = vmul.f32 %v525, %v547
      %v613 = vmul.f32 %v524, %v552
      %v614 = vmul.f32 %v523, %v557
      %v615 = vmul.f32 %v522, %v562
      %v616 = vmul.f32 %v521, %v567
      %v617 = vmul.f32 %v520, %v572
      %v618 = vmul.f32 %v519, %v577
      %v619 = vmul.f32 %v518, %v582
      %v620 = vmul.f32 %v517, %v587
      %v621 = vmul.f32 %v516, %v592
      %v622 = vmul.f32 %v515, %v597
      %v623 = vmul.f32 %v514, %v602
      %v624 = vmul.f32 %v513, %v607
      %v625 = vpack.c.bf16 %v610, %v609
      %v626 = vpack.c.bf16 %v612, %v611
      %v627 = vpack.c.bf16 %v614, %v613
      %v628 = vpack.c.bf16 %v616, %v615
      %v629 = vpack.c.bf16 %v618, %v617
      %v630 = vpack.c.bf16 %v620, %v619
      %v631 = vpack.c.bf16 %v622, %v621
      %v632 = vpack.c.bf16 %v624, %v623
      %v633 = vrot.slane %v478, 1
      %v634 = vrot.slane %v479, 1
      %v635 = vrot.slane %v480, 1
      %v636 = vrot.slane %v481, 1
      %v637 = vrot.slane %v482, 1
      %v638 = vrot.slane %v483, 1
      %v639 = vrot.slane %v484, 1
      %v640 = vrot.slane %v485, 1
      %v641 = vrot.slane %v486, 1
      %v642 = vrot.slane %v487, 1
      %v643 = vrot.slane %v488, 1
      %v644 = vrot.slane %v489, 1
      %v645 = vrot.slane %v490, 1
      %v646 = vrot.slane %v491, 1
      %v647 = vrot.slane %v492, 1
      %v648 = vrot.slane %v493, 1
      %vm649 = vcmp.lt.s32.totalorder %v511, 7
      %v650 = vsel %vm649, %v647, %v648
      %v651 = vsel %vm649, %v646, %v647
      %v652 = vsel %vm649, %v645, %v646
      %v653 = vsel %vm649, %v644, %v645
      %v654 = vsel %vm649, %v643, %v644
      %v655 = vsel %vm649, %v642, %v643
      %v656 = vsel %vm649, %v641, %v642
      %v657 = vsel %vm649, %v640, %v641
      %v658 = vsel %vm649, %v639, %v640
      %v659 = vsel %vm649, %v638, %v639
      %v660 = vsel %vm649, %v637, %v638
      %v661 = vsel %vm649, %v636, %v637
      %v662 = vsel %vm649, %v635, %v636
      %v663 = vsel %vm649, %v634, %v635
      %v664 = vsel %vm649, %v633, %v634
      %v665 = vsel %vm649, %v648, %v633
      %667 = vset.pattern.permute.xlu0 0
      %668 = vperm.xlu0 %667, %v462
      %v669 = vpop.permute.xlu0 %668
      %672 = vset.pattern.permute.xlu0 0
      %673 = vperm.xlu0 %672, %v463
      %v674 = vpop.permute.xlu0 %673
      %677 = vset.pattern.permute.xlu0 0
      %678 = vperm.xlu0 %677, %v464
      %v679 = vpop.permute.xlu0 %678
      %682 = vset.pattern.permute.xlu0 0
      %683 = vperm.xlu0 %682, %v465
      %v684 = vpop.permute.xlu0 %683
      %687 = vset.pattern.permute.xlu0 0
      %688 = vperm.xlu0 %687, %v466
      %v689 = vpop.permute.xlu0 %688
      %692 = vset.pattern.permute.xlu0 0
      %693 = vperm.xlu0 %692, %v467
      %v694 = vpop.permute.xlu0 %693
      %697 = vset.pattern.permute.xlu0 0
      %698 = vperm.xlu0 %697, %v468
      %v699 = vpop.permute.xlu0 %698
      %702 = vset.pattern.permute.xlu0 0
      %703 = vperm.xlu0 %702, %v469
      %v704 = vpop.permute.xlu0 %703
      %707 = vset.pattern.permute.xlu0 0
      %708 = vperm.xlu0 %707, %v470
      %v709 = vpop.permute.xlu0 %708
      %712 = vset.pattern.permute.xlu0 0
      %713 = vperm.xlu0 %712, %v471
      %v714 = vpop.permute.xlu0 %713
      %717 = vset.pattern.permute.xlu0 0
      %718 = vperm.xlu0 %717, %v472
      %v719 = vpop.permute.xlu0 %718
      %722 = vset.pattern.permute.xlu0 0
      %723 = vperm.xlu0 %722, %v473
      %v724 = vpop.permute.xlu0 %723
      %727 = vset.pattern.permute.xlu0 0
      %728 = vperm.xlu0 %727, %v474
      %v729 = vpop.permute.xlu0 %728
      %732 = vset.pattern.permute.xlu0 0
      %733 = vperm.xlu0 %732, %v475
      %v734 = vpop.permute.xlu0 %733
      %737 = vset.pattern.permute.xlu0 0
      %738 = vperm.xlu0 %737, %v476
      %v739 = vpop.permute.xlu0 %738
      %742 = vset.pattern.permute.xlu0 0
      %743 = vperm.xlu0 %742, %v477
      %v744 = vpop.permute.xlu0 %743
      %v746 = vmul.f32 %v664, %v669
      %v747 = vmul.f32 %v663, %v674
      %v748 = vmul.f32 %v662, %v679
      %v749 = vmul.f32 %v661, %v684
      %v750 = vmul.f32 %v660, %v689
      %v751 = vmul.f32 %v659, %v694
      %v752 = vmul.f32 %v658, %v699
      %v753 = vmul.f32 %v657, %v704
      %v754 = vmul.f32 %v656, %v709
      %v755 = vmul.f32 %v655, %v714
      %v756 = vmul.f32 %v654, %v719
      %v757 = vmul.f32 %v653, %v724
      %v758 = vmul.f32 %v652, %v729
      %v759 = vmul.f32 %v651, %v734
      %v760 = vmul.f32 %v650, %v739
      %v761 = vmul.f32 %v665, %v744
      %v762 = vpack.c.bf16 %v747, %v746
      %v763 = vpack.c.bf16 %v749, %v748
      %v764 = vpack.c.bf16 %v751, %v750
      %v765 = vpack.c.bf16 %v753, %v752
      %v766 = vpack.c.bf16 %v755, %v754
      %v767 = vpack.c.bf16 %v757, %v756
      %v768 = vpack.c.bf16 %v759, %v758
      %v769 = vpack.c.bf16 %v761, %v760
      %v770 = vpack.c.bf16 %v479, %v478
      %v771 = vpack.c.bf16 %v481, %v480
      %v772 = vpack.c.bf16 %v483, %v482
      %v773 = vpack.c.bf16 %v485, %v484
      %v774 = vpack.c.bf16 %v487, %v486
      %v775 = vpack.c.bf16 %v489, %v488
      %v776 = vpack.c.bf16 %v491, %v490
      %v777 = vpack.c.bf16 %v493, %v492
      %v778 = vld [vmem:[%s1] sm:$0x3]
      %v779 = vld [vmem:[%s2] sm:$0x3]
      %vm780 = vcmask 31744
      %v782 = vsel %vm780, %v770, 0
      %v785 = vsel %vm780, %v771, 0
      %v788 = vsel %vm780, %v772, 0
      %v791 = vsel %vm780, %v773, 0
      %v794 = vsel %vm780, %v774, 0
      %v797 = vsel %vm780, %v775, 0
      %v800 = vsel %vm780, %v776, 0
      %v803 = vsel %vm780, %v777, 0
      %vm805 = vcmask 1041408
      %v807 = vsel %vm805, %v779, 0
      %809 = vmatprep.subr.bf16.mxu0 0
      %810 = vmatpush1.bf16.msra.mxu0 %v807
      %811 = vmatprep.subr.bf16.mxu0 0
      %812 = vmatpush1.bf16.msra.mxu0 0
      %813 = vmatprep.subr.bf16.mxu0 0
      %814 = vmatpush1.bf16.msra.mxu0 0
      %815 = vmatprep.subr.bf16.mxu0 0
      %816 = vmatpush1.bf16.msra.mxu0 0
      %817 = vmatprep.subr.bf16.mxu0 0
      %818 = vmatpush1.bf16.msra.mxu0 0
      %819 = vmatprep.subr.bf16.mxu0 0
      %820 = vmatpush1.bf16.msra.mxu0 0
      %821 = vmatprep.subr.bf16.mxu0 0
      %822 = vmatpush1.bf16.msra.mxu0 0
      %823 = vmatprep.subr.bf16.mxu0 0
      %824 = vmatpush1.bf16.msra.mxu0 0
      %825 = vmatprep.subr.bf16.mxu0 0
      %826 = vmatpush1.bf16.msra.mxu0 0
      %827 = vmatprep.subr.bf16.mxu0 0
      %828 = vmatpush1.bf16.msra.mxu0 0
      %829 = vmatprep.subr.bf16.mxu0 0
      %830 = vmatpush1.bf16.msra.mxu0 0
      %831 = vmatprep.subr.bf16.mxu0 0
      %832 = vmatpush1.bf16.msra.mxu0 0
      %833 = vmatprep.subr.bf16.mxu0 0
      %834 = vmatpush1.bf16.msra.mxu0 0
      %835 = vmatprep.subr.bf16.mxu0 0
      %836 = vmatpush1.bf16.msra.mxu0 0
      %837 = vmatprep.subr.bf16.mxu0 0
      %838 = vmatpush1.bf16.msra.mxu0 0
      %839 = vmatprep.subr.bf16.mxu0 0
      %840 = vmatpush1.bf16.msra.mxu0 0
      %841 = vmatprep.mubr.bf16.mxu0 0
      %842 = vmatmul.mubr.bf16.gmra.mrb[0].mxu0 %v782
      %v843 = vpop.f32.mrb[0].mxu0
      %v844 = vadd.f32 0.0, %v843
      %v845 = vpop.f32.mrb[0].mxu0
      %v846 = vpop.f32.mrb[0].mxu0
      %v847 = vadd.f32 0.0, %v846
      %v848 = vpop.f32.mrb[0].mxu0
      %849 = vmatprep.mubr.bf16.mxu0 0
      %850 = vmatmul.mubr.bf16.gmra.mrb[0].mxu0 %v785
      %v851 = vpop.f32.mrb[0].mxu0
      %v852 = vadd.f32 0.0, %v851
      %v853 = vpop.f32.mrb[0].mxu0
      %v854 = vpop.f32.mrb[0].mxu0
      %v855 = vadd.f32 0.0, %v854
      %v856 = vpop.f32.mrb[0].mxu0
      %857 = vmatprep.mubr.bf16.mxu0 0
      %858 = vmatmul.mubr.bf16.gmra.mrb[0].mxu0 %v788
      %v859 = vpop.f32.mrb[0].mxu0
      %v860 = vadd.f32 0.0, %v859
      %v861 = vpop.f32.mrb[0].mxu0
      %v862 = vpop.f32.mrb[0].mxu0
      %v863 = vadd.f32 0.0, %v862
      %v864 = vpop.f32.mrb[0].mxu0
      %865 = vmatprep.mubr.bf16.mxu0 0
      %866 = vmatmul.mubr.bf16.gmra.mrb[0].mxu0 %v791
      %v867 = vpop.f32.mrb[0].mxu0
      %v868 = vadd.f32 0.0, %v867
      %v869 = vpop.f32.mrb[0].mxu0
      %v870 = vpop.f32.mrb[0].mxu0
      %v871 = vadd.f32 0.0, %v870
      %v872 = vpop.f32.mrb[0].mxu0
      %873 = vmatprep.mubr.bf16.mxu0 0
      %874 = vmatmul.mubr.bf16.gmra.mrb[0].mxu0 %v794
      %v875 = vpop.f32.mrb[0].mxu0
      %v876 = vadd.f32 0.0, %v875
      %v877 = vpop.f32.mrb[0].mxu0
      %v878 = vpop.f32.mrb[0].mxu0
      %v879 = vadd.f32 0.0, %v878
      %v880 = vpop.f32.mrb[0].mxu0
      %881 = vmatprep.mubr.bf16.mxu0 0
      %882 = vmatmul.mubr.bf16.gmra.mrb[0].mxu0 %v797
      %v883 = vpop.f32.mrb[0].mxu0
      %v884 = vadd.f32 0.0, %v883
      %v885 = vpop.f32.mrb[0].mxu0
      %v886 = vpop.f32.mrb[0].mxu0
      %v887 = vadd.f32 0.0, %v886
      %v888 = vpop.f32.mrb[0].mxu0
      %889 = vmatprep.mubr.bf16.mxu0 0
      %890 = vmatmul.mubr.bf16.gmra.mrb[0].mxu0 %v800
      %v891 = vpop.f32.mrb[0].mxu0
      %v892 = vadd.f32 0.0, %v891
      %v893 = vpop.f32.mrb[0].mxu0
      %v894 = vpop.f32.mrb[0].mxu0
      %v895 = vadd.f32 0.0, %v894
      %v896 = vpop.f32.mrb[0].mxu0
      %897 = vmatprep.mubr.bf16.mxu0 0
      %898 = vmatmul.mubr.bf16.gmra.mrb[0].mxu0 %v803
      %v899 = vpop.f32.mrb[0].mxu0
      %v900 = vadd.f32 0.0, %v899
      %v901 = vpop.f32.mrb[0].mxu0
      %v902 = vpop.f32.mrb[0].mxu0
      %v903 = vadd.f32 0.0, %v902
      %v904 = vpop.f32.mrb[0].mxu0
      %905 = vdwg.mxu0
      %v907 = vsel %vm780, %v625, 0
      %v910 = vsel %vm780, %v626, 0
      %v913 = vsel %vm780, %v627, 0
      %v916 = vsel %vm780, %v628, 0
      %v919 = vsel %vm780, %v629, 0
      %v922 = vsel %vm780, %v630, 0
      %v925 = vsel %vm780, %v631, 0
      %v928 = vsel %vm780, %v632, 0
      %v931 = vsel %vm805, %v778, 0
      %933 = vmatprep.subr.bf16.mxu0 0
      %934 = vmatpush1.bf16.msra.mxu0 %v931
      %935 = vmatprep.subr.bf16.mxu0 0
      %936 = vmatpush1.bf16.msra.mxu0 0
      %937 = vmatprep.subr.bf16.mxu0 0
      %938 = vmatpush1.bf16.msra.mxu0 0
      %939 = vmatprep.subr.bf16.mxu0 0
      %940 = vmatpush1.bf16.msra.mxu0 0
      %941 = vmatprep.subr.bf16.mxu0 0
      %942 = vmatpush1.bf16.msra.mxu0 0
      %943 = vmatprep.subr.bf16.mxu0 0
      %944 = vmatpush1.bf16.msra.mxu0 0
      %945 = vmatprep.subr.bf16.mxu0 0
      %946 = vmatpush1.bf16.msra.mxu0 0
      %947 = vmatprep.subr.bf16.mxu0 0
      %948 = vmatpush1.bf16.msra.mxu0 0
      %949 = vmatprep.subr.bf16.mxu0 0
      %950 = vmatpush1.bf16.msra.mxu0 0
      %951 = vmatprep.subr.bf16.mxu0 0
      %952 = vmatpush1.bf16.msra.mxu0 0
      %953 = vmatprep.subr.bf16.mxu0 0
      %954 = vmatpush1.bf16.msra.mxu0 0
      %955 = vmatprep.subr.bf16.mxu0 0
      %956 = vmatpush1.bf16.msra.mxu0 0
      %957 = vmatprep.subr.bf16.mxu0 0
      %958 = vmatpush1.bf16.msra.mxu0 0
      %959 = vmatprep.subr.bf16.mxu0 0
      %960 = vmatpush1.bf16.msra.mxu0 0
      %961 = vmatprep.subr.bf16.mxu0 0
      %962 = vmatpush1.bf16.msra.mxu0 0
      %963 = vmatprep.subr.bf16.mxu0 0
      %964 = vmatpush1.bf16.msra.mxu0 0
      %965 = vmatprep.mubr.bf16.mxu0 0
      %966 = vmatmul.mubr.bf16.gmra.mrb[0].mxu0 %v907
      %v967 = vpop.f32.mrb[0].mxu0
      %v968 = vadd.f32 %v844, %v967
      %v969 = vpop.f32.mrb[0].mxu0
      %v970 = vpop.f32.mrb[0].mxu0
      %v971 = vadd.f32 %v847, %v970
      %v972 = vpop.f32.mrb[0].mxu0
      %973 = vmatprep.mubr.bf16.mxu0 0
      %974 = vmatmul.mubr.bf16.gmra.mrb[0].mxu0 %v910
      %v975 = vpop.f32.mrb[0].mxu0
      %v976 = vadd.f32 %v852, %v975
      %v977 = vpop.f32.mrb[0].mxu0
      %v978 = vpop.f32.mrb[0].mxu0
      %v979 = vadd.f32 %v855, %v978
      %v980 = vpop.f32.mrb[0].mxu0
      %981 = vmatprep.mubr.bf16.mxu0 0
      %982 = vmatmul.mubr.bf16.gmra.mrb[0].mxu0 %v913
      %v983 = vpop.f32.mrb[0].mxu0
      %v984 = vadd.f32 %v860, %v983
      %v985 = vpop.f32.mrb[0].mxu0
      %v986 = vpop.f32.mrb[0].mxu0
      %v987 = vadd.f32 %v863, %v986
      %v988 = vpop.f32.mrb[0].mxu0
      %989 = vmatprep.mubr.bf16.mxu0 0
      %990 = vmatmul.mubr.bf16.gmra.mrb[0].mxu0 %v916
      %v991 = vpop.f32.mrb[0].mxu0
      %v992 = vadd.f32 %v868, %v991
      %v993 = vpop.f32.mrb[0].mxu0
      %v994 = vpop.f32.mrb[0].mxu0
      %v995 = vadd.f32 %v871, %v994
      %v996 = vpop.f32.mrb[0].mxu0
      %997 = vmatprep.mubr.bf16.mxu0 0
      %998 = vmatmul.mubr.bf16.gmra.mrb[0].mxu0 %v919
      %v999 = vpop.f32.mrb[0].mxu0
      %v1000 = vadd.f32 %v876, %v999
      %v1001 = vpop.f32.mrb[0].mxu0
      %v1002 = vpop.f32.mrb[0].mxu0
      %v1003 = vadd.f32 %v879, %v1002
      %v1004 = vpop.f32.mrb[0].mxu0
      %1005 = vmatprep.mubr.bf16.mxu0 0
      %1006 = vmatmul.mubr.bf16.gmra.mrb[0].mxu0 %v922
      %v1007 = vpop.f32.mrb[0].mxu0
      %v1008 = vadd.f32 %v884, %v1007
      %v1009 = vpop.f32.mrb[0].mxu0
      %v1010 = vpop.f32.mrb[0].mxu0
      %v1011 = vadd.f32 %v887, %v1010
      %v1012 = vpop.f32.mrb[0].mxu0
      %1013 = vmatprep.mubr.bf16.mxu0 0
      %1014 = vmatmul.mubr.bf16.gmra.mrb[0].mxu0 %v925
      %v1015 = vpop.f32.mrb[0].mxu0
      %v1016 = vadd.f32 %v892, %v1015
      %v1017 = vpop.f32.mrb[0].mxu0
      %v1018 = vpop.f32.mrb[0].mxu0
      %v1019 = vadd.f32 %v895, %v1018
      %v1020 = vpop.f32.mrb[0].mxu0
      %1021 = vmatprep.mubr.bf16.mxu0 0
      %1022 = vmatmul.mubr.bf16.gmra.mrb[0].mxu0 %v928
      %v1023 = vpop.f32.mrb[0].mxu0
      %v1024 = vadd.f32 %v900, %v1023
      %v1025 = vpop.f32.mrb[0].mxu0
      %v1026 = vpop.f32.mrb[0].mxu0
      %v1027 = vadd.f32 %v903, %v1026
      %v1028 = vpop.f32.mrb[0].mxu0
      %1029 = vdwg.mxu0
      %v1030 = vld [vmem:[%s3] sm:$0x3]
      %v1032 = vsel %vm780, %v762, 0
      %v1035 = vsel %vm780, %v763, 0
      %v1038 = vsel %vm780, %v764, 0
      %v1041 = vsel %vm780, %v765, 0
      %v1044 = vsel %vm780, %v766, 0
      %v1047 = vsel %vm780, %v767, 0
      %v1050 = vsel %vm780, %v768, 0
      %v1053 = vsel %vm780, %v769, 0
      %v1056 = vsel %vm805, %v1030, 0
      %1058 = vmatprep.subr.bf16.mxu0 0
      %1059 = vmatpush1.bf16.msra.mxu0 %v1056
      %1060 = vmatprep.subr.bf16.mxu0 0
      %1061 = vmatpush1.bf16.msra.mxu0 0
      %1062 = vmatprep.subr.bf16.mxu0 0
      %1063 = vmatpush1.bf16.msra.mxu0 0
      %1064 = vmatprep.subr.bf16.mxu0 0
      %1065 = vmatpush1.bf16.msra.mxu0 0
      %1066 = vmatprep.subr.bf16.mxu0 0
      %1067 = vmatpush1.bf16.msra.mxu0 0
      %1068 = vmatprep.subr.bf16.mxu0 0
      %1069 = vmatpush1.bf16.msra.mxu0 0
      %1070 = vmatprep.subr.bf16.mxu0 0
      %1071 = vmatpush1.bf16.msra.mxu0 0
      %1072 = vmatprep.subr.bf16.mxu0 0
      %1073 = vmatpush1.bf16.msra.mxu0 0
      %1074 = vmatprep.subr.bf16.mxu0 0
      %1075 = vmatpush1.bf16.msra.mxu0 0
      %1076 = vmatprep.subr.bf16.mxu0 0
      %1077 = vmatpush1.bf16.msra.mxu0 0
      %1078 = vmatprep.subr.bf16.mxu0 0
      %1079 = vmatpush1.bf16.msra.mxu0 0
      %1080 = vmatprep.subr.bf16.mxu0 0
      %1081 = vmatpush1.bf16.msra.mxu0 0
      %1082 = vmatprep.subr.bf16.mxu0 0
      %1083 = vmatpush1.bf16.msra.mxu0 0
      %1084 = vmatprep.subr.bf16.mxu0 0
      %1085 = vmatpush1.bf16.msra.mxu0 0
      %1086 = vmatprep.subr.bf16.mxu0 0
      %1087 = vmatpush1.bf16.msra.mxu0 0
      %1088 = vmatprep.subr.bf16.mxu0 0
      %1089 = vmatpush1.bf16.msra.mxu0 0
      %1090 = vmatprep.mubr.bf16.mxu0 0
      %1091 = vmatmul.mubr.bf16.gmra.mrb[0].mxu0 %v1032
      %v1092 = vpop.f32.mrb[0].mxu0
      %v1093 = vadd.f32 0.0, %v1092
      %v1094 = vpop.f32.mrb[0].mxu0
      %v1095 = vpop.f32.mrb[0].mxu0
      %v1096 = vadd.f32 0.0, %v1095
      %v1097 = vpop.f32.mrb[0].mxu0
      %1098 = vmatprep.mubr.bf16.mxu0 0
      %1099 = vmatmul.mubr.bf16.gmra.mrb[0].mxu0 %v1035
      %v1100 = vpop.f32.mrb[0].mxu0
      %v1101 = vadd.f32 0.0, %v1100
      %v1102 = vpop.f32.mrb[0].mxu0
      %v1103 = vpop.f32.mrb[0].mxu0
      %v1104 = vadd.f32 0.0, %v1103
      %v1105 = vpop.f32.mrb[0].mxu0
      %1106 = vmatprep.mubr.bf16.mxu0 0
      %1107 = vmatmul.mubr.bf16.gmra.mrb[0].mxu0 %v1038
      %v1108 = vpop.f32.mrb[0].mxu0
      %v1109 = vadd.f32 0.0, %v1108
      %v1110 = vpop.f32.mrb[0].mxu0
      %v1111 = vpop.f32.mrb[0].mxu0
      %v1112 = vadd.f32 0.0, %v1111
      %v1113 = vpop.f32.mrb[0].mxu0
      %1114 = vmatprep.mubr.bf16.mxu0 0
      %1115 = vmatmul.mubr.bf16.gmra.mrb[0].mxu0 %v1041
      %v1116 = vpop.f32.mrb[0].mxu0
      %v1117 = vadd.f32 0.0, %v1116
      %v1118 = vpop.f32.mrb[0].mxu0
      %v1119 = vpop.f32.mrb[0].mxu0
      %v1120 = vadd.f32 0.0, %v1119
      %v1121 = vpop.f32.mrb[0].mxu0
      %1122 = vmatprep.mubr.bf16.mxu0 0
      %1123 = vmatmul.mubr.bf16.gmra.mrb[0].mxu0 %v1044
      %v1124 = vpop.f32.mrb[0].mxu0
      %v1125 = vadd.f32 0.0, %v1124
      %v1126 = vpop.f32.mrb[0].mxu0
      %v1127 = vpop.f32.mrb[0].mxu0
      %v1128 = vadd.f32 0.0, %v1127
      %v1129 = vpop.f32.mrb[0].mxu0
      %1130 = vmatprep.mubr.bf16.mxu0 0
      %1131 = vmatmul.mubr.bf16.gmra.mrb[0].mxu0 %v1047
      %v1132 = vpop.f32.mrb[0].mxu0
      %v1133 = vadd.f32 0.0, %v1132
      %v1134 = vpop.f32.mrb[0].mxu0
      %v1135 = vpop.f32.mrb[0].mxu0
      %v1136 = vadd.f32 0.0, %v1135
      %v1137 = vpop.f32.mrb[0].mxu0
      %1138 = vmatprep.mubr.bf16.mxu0 0
      %1139 = vmatmul.mubr.bf16.gmra.mrb[0].mxu0 %v1050
      %v1140 = vpop.f32.mrb[0].mxu0
      %v1141 = vadd.f32 0.0, %v1140
      %v1142 = vpop.f32.mrb[0].mxu0
      %v1143 = vpop.f32.mrb[0].mxu0
      %v1144 = vadd.f32 0.0, %v1143
      %v1145 = vpop.f32.mrb[0].mxu0
      %1146 = vmatprep.mubr.bf16.mxu0 0
      %1147 = vmatmul.mubr.bf16.gmra.mrb[0].mxu0 %v1053
      %v1148 = vpop.f32.mrb[0].mxu0
      %v1149 = vadd.f32 0.0, %v1148
      %v1150 = vpop.f32.mrb[0].mxu0
      %v1151 = vpop.f32.mrb[0].mxu0
      %v1152 = vadd.f32 0.0, %v1151
      %v1153 = vpop.f32.mrb[0].mxu0
      %1154 = vdwg.mxu0
      %v1155 = vadd.f32 %v968, %v1093
      %v1156 = vadd.f32 %v971, %v1096
      %v1157 = vadd.f32 %v976, %v1101
      %v1158 = vadd.f32 %v979, %v1104
      %v1159 = vadd.f32 %v984, %v1109
      %v1160 = vadd.f32 %v987, %v1112
      %v1161 = vadd.f32 %v992, %v1117
      %v1162 = vadd.f32 %v995, %v1120
      %v1163 = vadd.f32 %v1000, %v1125
      %v1164 = vadd.f32 %v1003, %v1128
      %v1165 = vadd.f32 %v1008, %v1133
      %v1166 = vadd.f32 %v1011, %v1136
      %v1167 = vadd.f32 %v1016, %v1141
      %v1168 = vadd.f32 %v1019, %v1144
      %v1169 = vadd.f32 %v1024, %v1149
      %v1170 = vadd.f32 %v1027, %v1152
      %v1171 = vld [vmem:[%s4] sm:$0x1]
      %v1173 = vlaneseq
      %v1174 = vshrl.u32 %v1173, 7
      %v1175 = vsub.s32 0, %v1174
      %v1176 = vrot.slane %v1171, %v1175
      %v1178 = vadd.f32 %v1155, %v1176
      %v1179 = vadd.f32 %v1156, %v1176
      %v1180 = vadd.f32 %v1157, %v1176
      %v1181 = vadd.f32 %v1158, %v1176
      %v1182 = vadd.f32 %v1159, %v1176
      %v1183 = vadd.f32 %v1160, %v1176
      %v1184 = vadd.f32 %v1161, %v1176
      %v1185 = vadd.f32 %v1162, %v1176
      %v1186 = vadd.f32 %v1163, %v1176
      %v1187 = vadd.f32 %v1164, %v1176
      %v1188 = vadd.f32 %v1165, %v1176
      %v1189 = vadd.f32 %v1166, %v1176
      %v1190 = vadd.f32 %v1167, %v1176
      %v1191 = vadd.f32 %v1168, %v1176
      %v1192 = vadd.f32 %v1169, %v1176
      %v1193 = vadd.f32 %v1170, %v1176
      %v1194 = vxor.u32 %v1178, 2147483648
      %v1195 = vxor.u32 %v1179, 2147483648
      %v1196 = vxor.u32 %v1180, 2147483648
      %v1197 = vxor.u32 %v1181, 2147483648
      %v1198 = vxor.u32 %v1182, 2147483648
      %v1199 = vxor.u32 %v1183, 2147483648
      %v1200 = vxor.u32 %v1184, 2147483648
      %v1201 = vxor.u32 %v1185, 2147483648
      %v1202 = vxor.u32 %v1186, 2147483648
      %v1203 = vxor.u32 %v1187, 2147483648
      %v1204 = vxor.u32 %v1188, 2147483648
      %v1205 = vxor.u32 %v1189, 2147483648
      %v1206 = vxor.u32 %v1190, 2147483648
      %v1207 = vxor.u32 %v1191, 2147483648
      %v1208 = vxor.u32 %v1192, 2147483648
      %v1209 = vxor.u32 %v1193, 2147483648
      %v1210 = vmul.f32 %v1194, 1.442695
      %v1211 = vpow.pop %v1210
      %v1212 = vmul.f32 %v1195, 1.442695
      %v1213 = vpow.pop %v1212
      %v1214 = vmul.f32 %v1196, 1.442695
      %v1215 = vpow.pop %v1214
      %v1216 = vmul.f32 %v1197, 1.442695
      %v1217 = vpow.pop %v1216
      %v1218 = vmul.f32 %v1198, 1.442695
      %v1219 = vpow.pop %v1218
      %v1220 = vmul.f32 %v1199, 1.442695
      %v1221 = vpow.pop %v1220
      %v1222 = vmul.f32 %v1200, 1.442695
      %v1223 = vpow.pop %v1222
      %v1224 = vmul.f32 %v1201, 1.442695
      %v1225 = vpow.pop %v1224
      %v1226 = vmul.f32 %v1202, 1.442695
      %v1227 = vpow.pop %v1226
      %v1228 = vmul.f32 %v1203, 1.442695
      %v1229 = vpow.pop %v1228
      %v1230 = vmul.f32 %v1204, 1.442695
      %v1231 = vpow.pop %v1230
      %v1232 = vmul.f32 %v1205, 1.442695
      %v1233 = vpow.pop %v1232
      %v1234 = vmul.f32 %v1206, 1.442695
      %v1235 = vpow.pop %v1234
      %v1236 = vmul.f32 %v1207, 1.442695
      %v1237 = vpow.pop %v1236
      %v1238 = vmul.f32 %v1208, 1.442695
      %v1239 = vpow.pop %v1238
      %v1240 = vmul.f32 %v1209, 1.442695
      %v1241 = vpow.pop %v1240
      %v1242 = vadd.f32 %v1211, 1.0
      %v1243 = vadd.f32 %v1213, 1.0
      %v1244 = vadd.f32 %v1215, 1.0
      %v1245 = vadd.f32 %v1217, 1.0
      %v1246 = vadd.f32 %v1219, 1.0
      %v1247 = vadd.f32 %v1221, 1.0
      %v1248 = vadd.f32 %v1223, 1.0
      %v1249 = vadd.f32 %v1225, 1.0
      %v1250 = vadd.f32 %v1227, 1.0
      %v1251 = vadd.f32 %v1229, 1.0
      %v1252 = vadd.f32 %v1231, 1.0
      %v1253 = vadd.f32 %v1233, 1.0
      %v1254 = vadd.f32 %v1235, 1.0
      %v1255 = vadd.f32 %v1237, 1.0
      %v1256 = vadd.f32 %v1239, 1.0
      %v1257 = vadd.f32 %v1241, 1.0
      %v1258 = vrcp.pop %v1242
      %v1259 = vmul.f32 1.0, %v1258
      %v1260 = vrcp.pop %v1243
      %v1261 = vmul.f32 1.0, %v1260
      %v1262 = vrcp.pop %v1244
      %v1263 = vmul.f32 1.0, %v1262
      %v1264 = vrcp.pop %v1245
      %v1265 = vmul.f32 1.0, %v1264
      %v1266 = vrcp.pop %v1246
      %v1267 = vmul.f32 1.0, %v1266
      %v1268 = vrcp.pop %v1247
      %v1269 = vmul.f32 1.0, %v1268
      %v1270 = vrcp.pop %v1248
      %v1271 = vmul.f32 1.0, %v1270
      %v1272 = vrcp.pop %v1249
      %v1273 = vmul.f32 1.0, %v1272
      %v1274 = vrcp.pop %v1250
      %v1275 = vmul.f32 1.0, %v1274
      %v1276 = vrcp.pop %v1251
      %v1277 = vmul.f32 1.0, %v1276
      %v1278 = vrcp.pop %v1252
      %v1279 = vmul.f32 1.0, %v1278
      %v1280 = vrcp.pop %v1253
      %v1281 = vmul.f32 1.0, %v1280
      %v1282 = vrcp.pop %v1254
      %v1283 = vmul.f32 1.0, %v1282
      %v1284 = vrcp.pop %v1255
      %v1285 = vmul.f32 1.0, %v1284
      %v1286 = vrcp.pop %v1256
      %v1287 = vmul.f32 1.0, %v1286
      %v1288 = vrcp.pop %v1257
      %v1289 = vmul.f32 1.0, %v1288
      %v1290 = vmax.f32 %v1178, 0.0
      %v1291 = vmax.f32 %v1179, 0.0
      %v1292 = vmax.f32 %v1180, 0.0
      %v1293 = vmax.f32 %v1181, 0.0
      %v1294 = vmax.f32 %v1182, 0.0
      %v1295 = vmax.f32 %v1183, 0.0
      %v1296 = vmax.f32 %v1184, 0.0
      %v1297 = vmax.f32 %v1185, 0.0
      %v1298 = vmax.f32 %v1186, 0.0
      %v1299 = vmax.f32 %v1187, 0.0
      %v1300 = vmax.f32 %v1188, 0.0
      %v1301 = vmax.f32 %v1189, 0.0
      %v1302 = vmax.f32 %v1190, 0.0
      %v1303 = vmax.f32 %v1191, 0.0
      %v1304 = vmax.f32 %v1192, 0.0
      %v1305 = vmax.f32 %v1193, 0.0
      %1322 = vrot.lane.b32.xlu0 %v1290, 120
      %v1323 = vpop.permute.xlu0 %1322
      %1324 = vrot.lane.b32.xlu0 %v1291, 120
      %v1325 = vpop.permute.xlu0 %1324
      %1326 = vrot.lane.b32.xlu0 %v1292, 120
      %v1327 = vpop.permute.xlu0 %1326
      %1328 = vrot.lane.b32.xlu0 %v1293, 120
      %v1329 = vpop.permute.xlu0 %1328
      %1330 = vrot.lane.b32.xlu0 %v1294, 120
      %v1331 = vpop.permute.xlu0 %1330
      %1332 = vrot.lane.b32.xlu0 %v1295, 120
      %v1333 = vpop.permute.xlu0 %1332
      %1334 = vrot.lane.b32.xlu0 %v1296, 120
      %v1335 = vpop.permute.xlu0 %1334
      %1336 = vrot.lane.b32.xlu0 %v1297, 120
      %v1337 = vpop.permute.xlu0 %1336
      %1338 = vrot.lane.b32.xlu0 %v1298, 120
      %v1339 = vpop.permute.xlu0 %1338
      %1340 = vrot.lane.b32.xlu0 %v1299, 120
      %v1341 = vpop.permute.xlu0 %1340
      %1342 = vrot.lane.b32.xlu0 %v1300, 120
      %v1343 = vpop.permute.xlu0 %1342
      %1344 = vrot.lane.b32.xlu0 %v1301, 120
      %v1345 = vpop.permute.xlu0 %1344
      %1346 = vrot.lane.b32.xlu0 %v1302, 120
      %v1347 = vpop.permute.xlu0 %1346
      %1348 = vrot.lane.b32.xlu0 %v1303, 120
      %v1349 = vpop.permute.xlu0 %1348
      %1350 = vrot.lane.b32.xlu0 %v1304, 120
      %v1351 = vpop.permute.xlu0 %1350
      %1352 = vrot.lane.b32.xlu0 %v1305, 120
      %v1353 = vpop.permute.xlu0 %1352
      %v1370 = vmul.f32 %v1259, %v1323
      %v1371 = vmul.f32 %v1261, %v1325
      %v1372 = vmul.f32 %v1263, %v1327
      %v1373 = vmul.f32 %v1265, %v1329
      %v1374 = vmul.f32 %v1267, %v1331
      %v1375 = vmul.f32 %v1269, %v1333
      %v1376 = vmul.f32 %v1271, %v1335
      %v1377 = vmul.f32 %v1273, %v1337
      %v1378 = vmul.f32 %v1275, %v1339
      %v1379 = vmul.f32 %v1277, %v1341
      %v1380 = vmul.f32 %v1279, %v1343
      %v1381 = vmul.f32 %v1281, %v1345
      %v1382 = vmul.f32 %v1283, %v1347
      %v1383 = vmul.f32 %v1285, %v1349
      %v1384 = vmul.f32 %v1287, %v1351
      %v1385 = vmul.f32 %v1289, %v1353
      %v1386 = vrot.slane %v1370, 7
      %v1387 = vrot.slane %v1371, 7
      %v1388 = vrot.slane %v1372, 7
      %v1389 = vrot.slane %v1373, 7
      %v1390 = vrot.slane %v1374, 7
      %v1391 = vrot.slane %v1375, 7
      %v1392 = vrot.slane %v1376, 7
      %v1393 = vrot.slane %v1377, 7
      %v1394 = vrot.slane %v1378, 7
      %v1395 = vrot.slane %v1379, 7
      %v1396 = vrot.slane %v1380, 7
      %v1397 = vrot.slane %v1381, 7
      %v1398 = vrot.slane %v1382, 7
      %v1399 = vrot.slane %v1383, 7
      %v1400 = vrot.slane %v1384, 7
      %v1401 = vrot.slane %v1385, 7
      %v1402 = vsel %vm512, %v1400, %v1401
      %v1403 = vsel %vm512, %v1399, %v1400
      %v1404 = vsel %vm512, %v1398, %v1399
      %v1405 = vsel %vm512, %v1397, %v1398
      %v1406 = vsel %vm512, %v1396, %v1397
      %v1407 = vsel %vm512, %v1395, %v1396
      %v1408 = vsel %vm512, %v1394, %v1395
      %v1409 = vsel %vm512, %v1393, %v1394
      %v1410 = vsel %vm512, %v1392, %v1393
      %v1411 = vsel %vm512, %v1391, %v1392
      %v1412 = vsel %vm512, %v1390, %v1391
      %v1413 = vsel %vm512, %v1389, %v1390
      %v1414 = vsel %vm512, %v1388, %v1389
      %v1415 = vsel %vm512, %v1387, %v1388
      %v1416 = vsel %vm512, %v1386, %v1387
      %v1417 = vsel %vm512, %v1401, %v1386
      %v1418 = vmul.f32 %v1417, %v532
      %v1419 = vmul.f32 %v1416, %v537
      %v1420 = vmul.f32 %v1415, %v542
      %v1421 = vmul.f32 %v1414, %v547
      %v1422 = vmul.f32 %v1413, %v552
      %v1423 = vmul.f32 %v1412, %v557
      %v1424 = vmul.f32 %v1411, %v562
      %v1425 = vmul.f32 %v1410, %v567
      %v1426 = vmul.f32 %v1409, %v572
      %v1427 = vmul.f32 %v1408, %v577
      %v1428 = vmul.f32 %v1407, %v582
      %v1429 = vmul.f32 %v1406, %v587
      %v1430 = vmul.f32 %v1405, %v592
      %v1431 = vmul.f32 %v1404, %v597
      %v1432 = vmul.f32 %v1403, %v602
      %v1433 = vmul.f32 %v1402, %v607
      %v1434 = vpack.c.bf16 %v1419, %v1418
      %v1435 = vpack.c.bf16 %v1421, %v1420
      %v1436 = vpack.c.bf16 %v1423, %v1422
      %v1437 = vpack.c.bf16 %v1425, %v1424
      %v1438 = vpack.c.bf16 %v1427, %v1426
      %v1439 = vpack.c.bf16 %v1429, %v1428
      %v1440 = vpack.c.bf16 %v1431, %v1430
      %v1441 = vpack.c.bf16 %v1433, %v1432
      %v1442 = vrot.slane %v1370, 1
      %v1443 = vrot.slane %v1371, 1
      %v1444 = vrot.slane %v1372, 1
      %v1445 = vrot.slane %v1373, 1
      %v1446 = vrot.slane %v1374, 1
      %v1447 = vrot.slane %v1375, 1
      %v1448 = vrot.slane %v1376, 1
      %v1449 = vrot.slane %v1377, 1
      %v1450 = vrot.slane %v1378, 1
      %v1451 = vrot.slane %v1379, 1
      %v1452 = vrot.slane %v1380, 1
      %v1453 = vrot.slane %v1381, 1
      %v1454 = vrot.slane %v1382, 1
      %v1455 = vrot.slane %v1383, 1
      %v1456 = vrot.slane %v1384, 1
      %v1457 = vrot.slane %v1385, 1
      %v1458 = vsel %vm649, %v1456, %v1457
      %v1459 = vsel %vm649, %v1455, %v1456
      %v1460 = vsel %vm649, %v1454, %v1455
      %v1461 = vsel %vm649, %v1453, %v1454
      %v1462 = vsel %vm649, %v1452, %v1453
      %v1463 = vsel %vm649, %v1451, %v1452
      %v1464 = vsel %vm649, %v1450, %v1451
      %v1465 = vsel %vm649, %v1449, %v1450
      %v1466 = vsel %vm649, %v1448, %v1449
      %v1467 = vsel %vm649, %v1447, %v1448
      %v1468 = vsel %vm649, %v1446, %v1447
      %v1469 = vsel %vm649, %v1445, %v1446
      %v1470 = vsel %vm649, %v1444, %v1445
      %v1471 = vsel %vm649, %v1443, %v1444
      %v1472 = vsel %vm649, %v1442, %v1443
      %v1473 = vsel %vm649, %v1457, %v1442
      %v1474 = vmul.f32 %v1472, %v669
      %v1475 = vmul.f32 %v1471, %v674
      %v1476 = vmul.f32 %v1470, %v679
      %v1477 = vmul.f32 %v1469, %v684
      %v1478 = vmul.f32 %v1468, %v689
      %v1479 = vmul.f32 %v1467, %v694
      %v1480 = vmul.f32 %v1466, %v699
      %v1481 = vmul.f32 %v1465, %v704
      %v1482 = vmul.f32 %v1464, %v709
      %v1483 = vmul.f32 %v1463, %v714
      %v1484 = vmul.f32 %v1462, %v719
      %v1485 = vmul.f32 %v1461, %v724
      %v1486 = vmul.f32 %v1460, %v729
      %v1487 = vmul.f32 %v1459, %v734
      %v1488 = vmul.f32 %v1458, %v739
      %v1489 = vmul.f32 %v1473, %v744
      %v1490 = vpack.c.bf16 %v1475, %v1474
      %v1491 = vpack.c.bf16 %v1477, %v1476
      %v1492 = vpack.c.bf16 %v1479, %v1478
      %v1493 = vpack.c.bf16 %v1481, %v1480
      %v1494 = vpack.c.bf16 %v1483, %v1482
      %v1495 = vpack.c.bf16 %v1485, %v1484
      %v1496 = vpack.c.bf16 %v1487, %v1486
      %v1497 = vpack.c.bf16 %v1489, %v1488
      %v1498 = vpack.c.bf16 %v1371, %v1370
      %v1499 = vpack.c.bf16 %v1373, %v1372
      %v1500 = vpack.c.bf16 %v1375, %v1374
      %v1501 = vpack.c.bf16 %v1377, %v1376
      %v1502 = vpack.c.bf16 %v1379, %v1378
      %v1503 = vpack.c.bf16 %v1381, %v1380
      %v1504 = vpack.c.bf16 %v1383, %v1382
      %v1505 = vpack.c.bf16 %v1385, %v1384
      %v1506 = vld [vmem:[%s5] sm:$0xf]
      %v1507 = vld [vmem:[%s6] sm:$0xf]
      %vm1508 = vcmask 64512
      %v1510 = vsel %vm1508, %v1498, 0
      %v1513 = vsel %vm1508, %v1499, 0
      %v1516 = vsel %vm1508, %v1500, 0
      %v1519 = vsel %vm1508, %v1501, 0
      %v1522 = vsel %vm1508, %v1502, 0
      %v1525 = vsel %vm1508, %v1503, 0
      %v1528 = vsel %vm1508, %v1504, 0
      %v1531 = vsel %vm1508, %v1505, 0
      %vm1533 = vcmask 1043456
      %v1535 = vsel %vm1533, %v1507, 0
      %1537 = vmatprep.subr.bf16.mxu0 0
      %1538 = vmatpush1.bf16.msra.mxu0 %v1535
      %1539 = vmatprep.subr.bf16.mxu0 0
      %1540 = vmatpush1.bf16.msra.mxu0 0
      %1541 = vmatprep.subr.bf16.mxu0 0
      %1542 = vmatpush1.bf16.msra.mxu0 0
      %1543 = vmatprep.subr.bf16.mxu0 0
      %1544 = vmatpush1.bf16.msra.mxu0 0
      %1545 = vmatprep.subr.bf16.mxu0 0
      %1546 = vmatpush1.bf16.msra.mxu0 0
      %1547 = vmatprep.subr.bf16.mxu0 0
      %1548 = vmatpush1.bf16.msra.mxu0 0
      %1549 = vmatprep.subr.bf16.mxu0 0
      %1550 = vmatpush1.bf16.msra.mxu0 0
      %1551 = vmatprep.subr.bf16.mxu0 0
      %1552 = vmatpush1.bf16.msra.mxu0 0
      %1553 = vmatprep.subr.bf16.mxu0 0
      %1554 = vmatpush1.bf16.msra.mxu0 0
      %1555 = vmatprep.subr.bf16.mxu0 0
      %1556 = vmatpush1.bf16.msra.mxu0 0
      %1557 = vmatprep.subr.bf16.mxu0 0
      %1558 = vmatpush1.bf16.msra.mxu0 0
      %1559 = vmatprep.subr.bf16.mxu0 0
      %1560 = vmatpush1.bf16.msra.mxu0 0
      %1561 = vmatprep.subr.bf16.mxu0 0
      %1562 = vmatpush1.bf16.msra.mxu0 0
      %1563 = vmatprep.subr.bf16.mxu0 0
      %1564 = vmatpush1.bf16.msra.mxu0 0
      %1565 = vmatprep.subr.bf16.mxu0 0
      %1566 = vmatpush1.bf16.msra.mxu0 0
      %1567 = vmatprep.subr.bf16.mxu0 0
      %1568 = vmatpush1.bf16.msra.mxu0 0
      %1569 = vmatprep.mubr.bf16.mxu0 0
      %1570 = vmatmul.mubr.bf16.gmra.mrb[0].mxu0 %v1510
      %v1571 = vpop.f32.mrb[0].mxu0
      %v1572 = vadd.f32 0.0, %v1571
      %v1573 = vpop.f32.mrb[0].mxu0
      %v1574 = vpop.f32.mrb[0].mxu0
      %v1575 = vadd.f32 0.0, %v1574
      %v1576 = vpop.f32.mrb[0].mxu0
      %1577 = vmatprep.mubr.bf16.mxu0 0
      %1578 = vmatmul.mubr.bf16.gmra.mrb[0].mxu0 %v1513
      %v1579 = vpop.f32.mrb[0].mxu0
      %v1580 = vadd.f32 0.0, %v1579
      %v1581 = vpop.f32.mrb[0].mxu0
      %v1582 = vpop.f32.mrb[0].mxu0
      %v1583 = vadd.f32 0.0, %v1582
      %v1584 = vpop.f32.mrb[0].mxu0
      %1585 = vmatprep.mubr.bf16.mxu0 0
      %1586 = vmatmul.mubr.bf16.gmra.mrb[0].mxu0 %v1516
      %v1587 = vpop.f32.mrb[0].mxu0
      %v1588 = vadd.f32 0.0, %v1587
      %v1589 = vpop.f32.mrb[0].mxu0
      %v1590 = vpop.f32.mrb[0].mxu0
      %v1591 = vadd.f32 0.0, %v1590
      %v1592 = vpop.f32.mrb[0].mxu0
      %1593 = vmatprep.mubr.bf16.mxu0 0
      %1594 = vmatmul.mubr.bf16.gmra.mrb[0].mxu0 %v1519
      %v1595 = vpop.f32.mrb[0].mxu0
      %v1596 = vadd.f32 0.0, %v1595
      %v1597 = vpop.f32.mrb[0].mxu0
      %v1598 = vpop.f32.mrb[0].mxu0
      %v1599 = vadd.f32 0.0, %v1598
      %v1600 = vpop.f32.mrb[0].mxu0
      %1601 = vmatprep.mubr.bf16.mxu0 0
      %1602 = vmatmul.mubr.bf16.gmra.mrb[0].mxu0 %v1522
      %v1603 = vpop.f32.mrb[0].mxu0
      %v1604 = vadd.f32 0.0, %v1603
      %v1605 = vpop.f32.mrb[0].mxu0
      %v1606 = vpop.f32.mrb[0].mxu0
      %v1607 = vadd.f32 0.0, %v1606
      %v1608 = vpop.f32.mrb[0].mxu0
      %1609 = vmatprep.mubr.bf16.mxu0 0
      %1610 = vmatmul.mubr.bf16.gmra.mrb[0].mxu0 %v1525
      %v1611 = vpop.f32.mrb[0].mxu0
      %v1612 = vadd.f32 0.0, %v1611
      %v1613 = vpop.f32.mrb[0].mxu0
      %v1614 = vpop.f32.mrb[0].mxu0
      %v1615 = vadd.f32 0.0, %v1614
      %v1616 = vpop.f32.mrb[0].mxu0
      %1617 = vmatprep.mubr.bf16.mxu0 0
      %1618 = vmatmul.mubr.bf16.gmra.mrb[0].mxu0 %v1528
      %v1619 = vpop.f32.mrb[0].mxu0
      %v1620 = vadd.f32 0.0, %v1619
      %v1621 = vpop.f32.mrb[0].mxu0
      %v1622 = vpop.f32.mrb[0].mxu0
      %v1623 = vadd.f32 0.0, %v1622
      %v1624 = vpop.f32.mrb[0].mxu0
      %1625 = vmatprep.mubr.bf16.mxu0 0
      %1626 = vmatmul.mubr.bf16.gmra.mrb[0].mxu0 %v1531
      %v1627 = vpop.f32.mrb[0].mxu0
      %v1628 = vadd.f32 0.0, %v1627
      %v1629 = vpop.f32.mrb[0].mxu0
      %v1630 = vpop.f32.mrb[0].mxu0
      %v1631 = vadd.f32 0.0, %v1630
      %v1632 = vpop.f32.mrb[0].mxu0
      %1633 = vdwg.mxu0
      %v1635 = vsel %vm1508, %v1434, 0
      %v1638 = vsel %vm1508, %v1435, 0
      %v1641 = vsel %vm1508, %v1436, 0
      %v1644 = vsel %vm1508, %v1437, 0
      %v1647 = vsel %vm1508, %v1438, 0
      %v1650 = vsel %vm1508, %v1439, 0
      %v1653 = vsel %vm1508, %v1440, 0
      %v1656 = vsel %vm1508, %v1441, 0
      %v1659 = vsel %vm1533, %v1506, 0
      %1661 = vmatprep.subr.bf16.mxu0 0
      %1662 = vmatpush1.bf16.msra.mxu0 %v1659
      %1663 = vmatprep.subr.bf16.mxu0 0
      %1664 = vmatpush1.bf16.msra.mxu0 0
      %1665 = vmatprep.subr.bf16.mxu0 0
      %1666 = vmatpush1.bf16.msra.mxu0 0
      %1667 = vmatprep.subr.bf16.mxu0 0
      %1668 = vmatpush1.bf16.msra.mxu0 0
      %1669 = vmatprep.subr.bf16.mxu0 0
      %1670 = vmatpush1.bf16.msra.mxu0 0
      %1671 = vmatprep.subr.bf16.mxu0 0
      %1672 = vmatpush1.bf16.msra.mxu0 0
      %1673 = vmatprep.subr.bf16.mxu0 0
      %1674 = vmatpush1.bf16.msra.mxu0 0
      %1675 = vmatprep.subr.bf16.mxu0 0
      %1676 = vmatpush1.bf16.msra.mxu0 0
      %1677 = vmatprep.subr.bf16.mxu0 0
      %1678 = vmatpush1.bf16.msra.mxu0 0
      %1679 = vmatprep.subr.bf16.mxu0 0
      %1680 = vmatpush1.bf16.msra.mxu0 0
      %1681 = vmatprep.subr.bf16.mxu0 0
      %1682 = vmatpush1.bf16.msra.mxu0 0
      %1683 = vmatprep.subr.bf16.mxu0 0
      %1684 = vmatpush1.bf16.msra.mxu0 0
      %1685 = vmatprep.subr.bf16.mxu0 0
      %1686 = vmatpush1.bf16.msra.mxu0 0
      %1687 = vmatprep.subr.bf16.mxu0 0
      %1688 = vmatpush1.bf16.msra.mxu0 0
      %1689 = vmatprep.subr.bf16.mxu0 0
      %1690 = vmatpush1.bf16.msra.mxu0 0
      %1691 = vmatprep.subr.bf16.mxu0 0
      %1692 = vmatpush1.bf16.msra.mxu0 0
      %1693 = vmatprep.mubr.bf16.mxu0 0
      %1694 = vmatmul.mubr.bf16.gmra.mrb[0].mxu0 %v1635
      %v1695 = vpop.f32.mrb[0].mxu0
      %v1696 = vadd.f32 %v1572, %v1695
      %v1697 = vpop.f32.mrb[0].mxu0
      %v1698 = vpop.f32.mrb[0].mxu0
      %v1699 = vadd.f32 %v1575, %v1698
      %v1700 = vpop.f32.mrb[0].mxu0
      %1701 = vmatprep.mubr.bf16.mxu0 0
      %1702 = vmatmul.mubr.bf16.gmra.mrb[0].mxu0 %v1638
      %v1703 = vpop.f32.mrb[0].mxu0
      %v1704 = vadd.f32 %v1580, %v1703
      %v1705 = vpop.f32.mrb[0].mxu0
      %v1706 = vpop.f32.mrb[0].mxu0
      %v1707 = vadd.f32 %v1583, %v1706
      %v1708 = vpop.f32.mrb[0].mxu0
      %1709 = vmatprep.mubr.bf16.mxu0 0
      %1710 = vmatmul.mubr.bf16.gmra.mrb[0].mxu0 %v1641
      %v1711 = vpop.f32.mrb[0].mxu0
      %v1712 = vadd.f32 %v1588, %v1711
      %v1713 = vpop.f32.mrb[0].mxu0
      %v1714 = vpop.f32.mrb[0].mxu0
      %v1715 = vadd.f32 %v1591, %v1714
      %v1716 = vpop.f32.mrb[0].mxu0
      %1717 = vmatprep.mubr.bf16.mxu0 0
      %1718 = vmatmul.mubr.bf16.gmra.mrb[0].mxu0 %v1644
      %v1719 = vpop.f32.mrb[0].mxu0
      %v1720 = vadd.f32 %v1596, %v1719
      %v1721 = vpop.f32.mrb[0].mxu0
      %v1722 = vpop.f32.mrb[0].mxu0
      %v1723 = vadd.f32 %v1599, %v1722
      %v1724 = vpop.f32.mrb[0].mxu0
      %1725 = vmatprep.mubr.bf16.mxu0 0
      %1726 = vmatmul.mubr.bf16.gmra.mrb[0].mxu0 %v1647
      %v1727 = vpop.f32.mrb[0].mxu0
      %v1728 = vadd.f32 %v1604, %v1727
      %v1729 = vpop.f32.mrb[0].mxu0
      %v1730 = vpop.f32.mrb[0].mxu0
      %v1731 = vadd.f32 %v1607, %v1730
      %v1732 = vpop.f32.mrb[0].mxu0
      %1733 = vmatprep.mubr.bf16.mxu0 0
      %1734 = vmatmul.mubr.bf16.gmra.mrb[0].mxu0 %v1650
      %v1735 = vpop.f32.mrb[0].mxu0
      %v1736 = vadd.f32 %v1612, %v1735
      %v1737 = vpop.f32.mrb[0].mxu0
      %v1738 = vpop.f32.mrb[0].mxu0
      %v1739 = vadd.f32 %v1615, %v1738
      %v1740 = vpop.f32.mrb[0].mxu0
      %1741 = vmatprep.mubr.bf16.mxu0 0
      %1742 = vmatmul.mubr.bf16.gmra.mrb[0].mxu0 %v1653
      %v1743 = vpop.f32.mrb[0].mxu0
      %v1744 = vadd.f32 %v1620, %v1743
      %v1745 = vpop.f32.mrb[0].mxu0
      %v1746 = vpop.f32.mrb[0].mxu0
      %v1747 = vadd.f32 %v1623, %v1746
      %v1748 = vpop.f32.mrb[0].mxu0
      %1749 = vmatprep.mubr.bf16.mxu0 0
      %1750 = vmatmul.mubr.bf16.gmra.mrb[0].mxu0 %v1656
      %v1751 = vpop.f32.mrb[0].mxu0
      %v1752 = vadd.f32 %v1628, %v1751
      %v1753 = vpop.f32.mrb[0].mxu0
      %v1754 = vpop.f32.mrb[0].mxu0
      %v1755 = vadd.f32 %v1631, %v1754
      %v1756 = vpop.f32.mrb[0].mxu0
      %1757 = vdwg.mxu0
      %v1758 = vld [vmem:[%s7] sm:$0xf]
      %v1760 = vsel %vm1508, %v1490, 0
      %v1763 = vsel %vm1508, %v1491, 0
      %v1766 = vsel %vm1508, %v1492, 0
      %v1769 = vsel %vm1508, %v1493, 0
      %v1772 = vsel %vm1508, %v1494, 0
      %v1775 = vsel %vm1508, %v1495, 0
      %v1778 = vsel %vm1508, %v1496, 0
      %v1781 = vsel %vm1508, %v1497, 0
      %v1784 = vsel %vm1533, %v1758, 0
      %1786 = vmatprep.subr.bf16.mxu0 0
      %1787 = vmatpush1.bf16.msra.mxu0 %v1784
      %1788 = vmatprep.subr.bf16.mxu0 0
      %1789 = vmatpush1.bf16.msra.mxu0 0
      %1790 = vmatprep.subr.bf16.mxu0 0
      %1791 = vmatpush1.bf16.msra.mxu0 0
      %1792 = vmatprep.subr.bf16.mxu0 0
      %1793 = vmatpush1.bf16.msra.mxu0 0
      %1794 = vmatprep.subr.bf16.mxu0 0
      %1795 = vmatpush1.bf16.msra.mxu0 0
      %1796 = vmatprep.subr.bf16.mxu0 0
      %1797 = vmatpush1.bf16.msra.mxu0 0
      %1798 = vmatprep.subr.bf16.mxu0 0
      %1799 = vmatpush1.bf16.msra.mxu0 0
      %1800 = vmatprep.subr.bf16.mxu0 0
      %1801 = vmatpush1.bf16.msra.mxu0 0
      %1802 = vmatprep.subr.bf16.mxu0 0
      %1803 = vmatpush1.bf16.msra.mxu0 0
      %1804 = vmatprep.subr.bf16.mxu0 0
      %1805 = vmatpush1.bf16.msra.mxu0 0
      %1806 = vmatprep.subr.bf16.mxu0 0
      %1807 = vmatpush1.bf16.msra.mxu0 0
      %1808 = vmatprep.subr.bf16.mxu0 0
      %1809 = vmatpush1.bf16.msra.mxu0 0
      %1810 = vmatprep.subr.bf16.mxu0 0
      %1811 = vmatpush1.bf16.msra.mxu0 0
      %1812 = vmatprep.subr.bf16.mxu0 0
      %1813 = vmatpush1.bf16.msra.mxu0 0
      %1814 = vmatprep.subr.bf16.mxu0 0
      %1815 = vmatpush1.bf16.msra.mxu0 0
      %1816 = vmatprep.subr.bf16.mxu0 0
      %1817 = vmatpush1.bf16.msra.mxu0 0
      %1818 = vmatprep.mubr.bf16.mxu0 0
      %1819 = vmatmul.mubr.bf16.gmra.mrb[0].mxu0 %v1760
      %v1820 = vpop.f32.mrb[0].mxu0
      %v1821 = vadd.f32 0.0, %v1820
      %v1822 = vpop.f32.mrb[0].mxu0
      %v1823 = vpop.f32.mrb[0].mxu0
      %v1824 = vadd.f32 0.0, %v1823
      %v1825 = vpop.f32.mrb[0].mxu0
      %1826 = vmatprep.mubr.bf16.mxu0 0
      %1827 = vmatmul.mubr.bf16.gmra.mrb[0].mxu0 %v1763
      %v1828 = vpop.f32.mrb[0].mxu0
      %v1829 = vadd.f32 0.0, %v1828
      %v1830 = vpop.f32.mrb[0].mxu0
      %v1831 = vpop.f32.mrb[0].mxu0
      %v1832 = vadd.f32 0.0, %v1831
      %v1833 = vpop.f32.mrb[0].mxu0
      %1834 = vmatprep.mubr.bf16.mxu0 0
      %1835 = vmatmul.mubr.bf16.gmra.mrb[0].mxu0 %v1766
      %v1836 = vpop.f32.mrb[0].mxu0
      %v1837 = vadd.f32 0.0, %v1836
      %v1838 = vpop.f32.mrb[0].mxu0
      %v1839 = vpop.f32.mrb[0].mxu0
      %v1840 = vadd.f32 0.0, %v1839
      %v1841 = vpop.f32.mrb[0].mxu0
      %1842 = vmatprep.mubr.bf16.mxu0 0
      %1843 = vmatmul.mubr.bf16.gmra.mrb[0].mxu0 %v1769
      %v1844 = vpop.f32.mrb[0].mxu0
      %v1845 = vadd.f32 0.0, %v1844
      %v1846 = vpop.f32.mrb[0].mxu0
      %v1847 = vpop.f32.mrb[0].mxu0
      %v1848 = vadd.f32 0.0, %v1847
      %v1849 = vpop.f32.mrb[0].mxu0
      %1850 = vmatprep.mubr.bf16.mxu0 0
      %1851 = vmatmul.mubr.bf16.gmra.mrb[0].mxu0 %v1772
      %v1852 = vpop.f32.mrb[0].mxu0
      %v1853 = vadd.f32 0.0, %v1852
      %v1854 = vpop.f32.mrb[0].mxu0
      %v1855 = vpop.f32.mrb[0].mxu0
      %v1856 = vadd.f32 0.0, %v1855
      %v1857 = vpop.f32.mrb[0].mxu0
      %1858 = vmatprep.mubr.bf16.mxu0 0
      %1859 = vmatmul.mubr.bf16.gmra.mrb[0].mxu0 %v1775
      %v1860 = vpop.f32.mrb[0].mxu0
      %v1861 = vadd.f32 0.0, %v1860
      %v1862 = vpop.f32.mrb[0].mxu0
      %v1863 = vpop.f32.mrb[0].mxu0
      %v1864 = vadd.f32 0.0, %v1863
      %v1865 = vpop.f32.mrb[0].mxu0
      %1866 = vmatprep.mubr.bf16.mxu0 0
      %1867 = vmatmul.mubr.bf16.gmra.mrb[0].mxu0 %v1778
      %v1868 = vpop.f32.mrb[0].mxu0
      %v1869 = vadd.f32 0.0, %v1868
      %v1870 = vpop.f32.mrb[0].mxu0
      %v1871 = vpop.f32.mrb[0].mxu0
      %v1872 = vadd.f32 0.0, %v1871
      %v1873 = vpop.f32.mrb[0].mxu0
      %1874 = vmatprep.mubr.bf16.mxu0 0
      %1875 = vmatmul.mubr.bf16.gmra.mrb[0].mxu0 %v1781
      %v1876 = vpop.f32.mrb[0].mxu0
      %v1877 = vadd.f32 0.0, %v1876
      %v1878 = vpop.f32.mrb[0].mxu0
      %v1879 = vpop.f32.mrb[0].mxu0
      %v1880 = vadd.f32 0.0, %v1879
      %v1881 = vpop.f32.mrb[0].mxu0
      %1882 = vdwg.mxu0
      %v1883 = vadd.f32 %v1696, %v1821
      %v1884 = vadd.f32 %v1699, %v1824
      %v1885 = vadd.f32 %v1704, %v1829
      %v1886 = vadd.f32 %v1707, %v1832
      %v1887 = vadd.f32 %v1712, %v1837
      %v1888 = vadd.f32 %v1715, %v1840
      %v1889 = vadd.f32 %v1720, %v1845
      %v1890 = vadd.f32 %v1723, %v1848
      %v1891 = vadd.f32 %v1728, %v1853
      %v1892 = vadd.f32 %v1731, %v1856
      %v1893 = vadd.f32 %v1736, %v1861
      %v1894 = vadd.f32 %v1739, %v1864
      %v1895 = vadd.f32 %v1744, %v1869
      %v1896 = vadd.f32 %v1747, %v1872
      %v1897 = vadd.f32 %v1752, %v1877
      %v1898 = vadd.f32 %v1755, %v1880
      %v1899 = vld [vmem:[%s8] sm:$0x1]
      %v1901 = vlaneseq
      %v1902 = vshrl.u32 %v1901, 7
      %v1903 = vsub.s32 0, %v1902
      %v1904 = vrot.slane %v1899, %v1903
      %v1906 = vadd.f32 %v1883, %v1904
      %v1907 = vadd.f32 %v1884, %v1904
      %v1908 = vadd.f32 %v1885, %v1904
      %v1909 = vadd.f32 %v1886, %v1904
      %v1910 = vadd.f32 %v1887, %v1904
      %v1911 = vadd.f32 %v1888, %v1904
      %v1912 = vadd.f32 %v1889, %v1904
      %v1913 = vadd.f32 %v1890, %v1904
      %v1914 = vadd.f32 %v1891, %v1904
      %v1915 = vadd.f32 %v1892, %v1904
      %v1916 = vadd.f32 %v1893, %v1904
      %v1917 = vadd.f32 %v1894, %v1904
      %v1918 = vadd.f32 %v1895, %v1904
      %v1919 = vadd.f32 %v1896, %v1904
      %v1920 = vadd.f32 %v1897, %v1904
      %v1921 = vadd.f32 %v1898, %v1904
      %v1922 = vxor.u32 %v1906, 2147483648
      %v1923 = vxor.u32 %v1907, 2147483648
      %v1924 = vxor.u32 %v1908, 2147483648
      %v1925 = vxor.u32 %v1909, 2147483648
      %v1926 = vxor.u32 %v1910, 2147483648
      %v1927 = vxor.u32 %v1911, 2147483648
      %v1928 = vxor.u32 %v1912, 2147483648
      %v1929 = vxor.u32 %v1913, 2147483648
      %v1930 = vxor.u32 %v1914, 2147483648
      %v1931 = vxor.u32 %v1915, 2147483648
      %v1932 = vxor.u32 %v1916, 2147483648
      %v1933 = vxor.u32 %v1917, 2147483648
      %v1934 = vxor.u32 %v1918, 2147483648
      %v1935 = vxor.u32 %v1919, 2147483648
      %v1936 = vxor.u32 %v1920, 2147483648
      %v1937 = vxor.u32 %v1921, 2147483648
      %v1938 = vmul.f32 %v1922, 1.442695
      %v1939 = vpow.pop %v1938
      %v1940 = vmul.f32 %v1923, 1.442695
      %v1941 = vpow.pop %v1940
      %v1942 = vmul.f32 %v1924, 1.442695
      %v1943 = vpow.pop %v1942
      %v1944 = vmul.f32 %v1925, 1.442695
      %v1945 = vpow.pop %v1944
      %v1946 = vmul.f32 %v1926, 1.442695
      %v1947 = vpow.pop %v1946
      %v1948 = vmul.f32 %v1927, 1.442695
      %v1949 = vpow.pop %v1948
      %v1950 = vmul.f32 %v1928, 1.442695
      %v1951 = vpow.pop %v1950
      %v1952 = vmul.f32 %v1929, 1.442695
      %v1953 = vpow.pop %v1952
      %v1954 = vmul.f32 %v1930, 1.442695
      %v1955 = vpow.pop %v1954
      %v1956 = vmul.f32 %v1931, 1.442695
      %v1957 = vpow.pop %v1956
      %v1958 = vmul.f32 %v1932, 1.442695
      %v1959 = vpow.pop %v1958
      %v1960 = vmul.f32 %v1933, 1.442695
      %v1961 = vpow.pop %v1960
      %v1962 = vmul.f32 %v1934, 1.442695
      %v1963 = vpow.pop %v1962
      %v1964 = vmul.f32 %v1935, 1.442695
      %v1965 = vpow.pop %v1964
      %v1966 = vmul.f32 %v1936, 1.442695
      %v1967 = vpow.pop %v1966
      %v1968 = vmul.f32 %v1937, 1.442695
      %v1969 = vpow.pop %v1968
      %v1970 = vadd.f32 %v1939, 1.0
      %v1971 = vadd.f32 %v1941, 1.0
      %v1972 = vadd.f32 %v1943, 1.0
      %v1973 = vadd.f32 %v1945, 1.0
      %v1974 = vadd.f32 %v1947, 1.0
      %v1975 = vadd.f32 %v1949, 1.0
      %v1976 = vadd.f32 %v1951, 1.0
      %v1977 = vadd.f32 %v1953, 1.0
      %v1978 = vadd.f32 %v1955, 1.0
      %v1979 = vadd.f32 %v1957, 1.0
      %v1980 = vadd.f32 %v1959, 1.0
      %v1981 = vadd.f32 %v1961, 1.0
      %v1982 = vadd.f32 %v1963, 1.0
      %v1983 = vadd.f32 %v1965, 1.0
      %v1984 = vadd.f32 %v1967, 1.0
      %v1985 = vadd.f32 %v1969, 1.0
      %v1986 = vrcp.pop %v1970
      %v1987 = vmul.f32 1.0, %v1986
      %v1988 = vrcp.pop %v1971
      %v1989 = vmul.f32 1.0, %v1988
      %v1990 = vrcp.pop %v1972
      %v1991 = vmul.f32 1.0, %v1990
      %v1992 = vrcp.pop %v1973
      %v1993 = vmul.f32 1.0, %v1992
      %v1994 = vrcp.pop %v1974
      %v1995 = vmul.f32 1.0, %v1994
      %v1996 = vrcp.pop %v1975
      %v1997 = vmul.f32 1.0, %v1996
      %v1998 = vrcp.pop %v1976
      %v1999 = vmul.f32 1.0, %v1998
      %v2000 = vrcp.pop %v1977
      %v2001 = vmul.f32 1.0, %v2000
      %v2002 = vrcp.pop %v1978
      %v2003 = vmul.f32 1.0, %v2002
      %v2004 = vrcp.pop %v1979
      %v2005 = vmul.f32 1.0, %v2004
      %v2006 = vrcp.pop %v1980
      %v2007 = vmul.f32 1.0, %v2006
      %v2008 = vrcp.pop %v1981
      %v2009 = vmul.f32 1.0, %v2008
      %v2010 = vrcp.pop %v1982
      %v2011 = vmul.f32 1.0, %v2010
      %v2012 = vrcp.pop %v1983
      %v2013 = vmul.f32 1.0, %v2012
      %v2014 = vrcp.pop %v1984
      %v2015 = vmul.f32 1.0, %v2014
      %v2016 = vrcp.pop %v1985
      %v2017 = vmul.f32 1.0, %v2016
      %v2018 = vmax.f32 %v1906, 0.0
      %v2019 = vmax.f32 %v1907, 0.0
      %v2020 = vmax.f32 %v1908, 0.0
      %v2021 = vmax.f32 %v1909, 0.0
      %v2022 = vmax.f32 %v1910, 0.0
      %v2023 = vmax.f32 %v1911, 0.0
      %v2024 = vmax.f32 %v1912, 0.0
      %v2025 = vmax.f32 %v1913, 0.0
      %v2026 = vmax.f32 %v1914, 0.0
      %v2027 = vmax.f32 %v1915, 0.0
      %v2028 = vmax.f32 %v1916, 0.0
      %v2029 = vmax.f32 %v1917, 0.0
      %v2030 = vmax.f32 %v1918, 0.0
      %v2031 = vmax.f32 %v1919, 0.0
      %v2032 = vmax.f32 %v1920, 0.0
      %v2033 = vmax.f32 %v1921, 0.0
      %2050 = vrot.lane.b32.xlu0 %v2018, 120
      %v2051 = vpop.permute.xlu0 %2050
      %2052 = vrot.lane.b32.xlu0 %v2019, 120
      %v2053 = vpop.permute.xlu0 %2052
      %2054 = vrot.lane.b32.xlu0 %v2020, 120
      %v2055 = vpop.permute.xlu0 %2054
      %2056 = vrot.lane.b32.xlu0 %v2021, 120
      %v2057 = vpop.permute.xlu0 %2056
      %2058 = vrot.lane.b32.xlu0 %v2022, 120
      %v2059 = vpop.permute.xlu0 %2058
      %2060 = vrot.lane.b32.xlu0 %v2023, 120
      %v2061 = vpop.permute.xlu0 %2060
      %2062 = vrot.lane.b32.xlu0 %v2024, 120
      %v2063 = vpop.permute.xlu0 %2062
      %2064 = vrot.lane.b32.xlu0 %v2025, 120
      %v2065 = vpop.permute.xlu0 %2064
      %2066 = vrot.lane.b32.xlu0 %v2026, 120
      %v2067 = vpop.permute.xlu0 %2066
      %2068 = vrot.lane.b32.xlu0 %v2027, 120
      %v2069 = vpop.permute.xlu0 %2068
      %2070 = vrot.lane.b32.xlu0 %v2028, 120
      %v2071 = vpop.permute.xlu0 %2070
      %2072 = vrot.lane.b32.xlu0 %v2029, 120
      %v2073 = vpop.permute.xlu0 %2072
      %2074 = vrot.lane.b32.xlu0 %v2030, 120
      %v2075 = vpop.permute.xlu0 %2074
      %2076 = vrot.lane.b32.xlu0 %v2031, 120
      %v2077 = vpop.permute.xlu0 %2076
      %2078 = vrot.lane.b32.xlu0 %v2032, 120
      %v2079 = vpop.permute.xlu0 %2078
      %2080 = vrot.lane.b32.xlu0 %v2033, 120
      %v2081 = vpop.permute.xlu0 %2080
      %v2098 = vmul.f32 %v1987, %v2051
      %v2099 = vmul.f32 %v1989, %v2053
      %v2100 = vmul.f32 %v1991, %v2055
      %v2101 = vmul.f32 %v1993, %v2057
      %v2102 = vmul.f32 %v1995, %v2059
      %v2103 = vmul.f32 %v1997, %v2061
      %v2104 = vmul.f32 %v1999, %v2063
      %v2105 = vmul.f32 %v2001, %v2065
      %v2106 = vmul.f32 %v2003, %v2067
      %v2107 = vmul.f32 %v2005, %v2069
      %v2108 = vmul.f32 %v2007, %v2071
      %v2109 = vmul.f32 %v2009, %v2073
      %v2110 = vmul.f32 %v2011, %v2075
      %v2111 = vmul.f32 %v2013, %v2077
      %v2112 = vmul.f32 %v2015, %v2079
      %v2113 = vmul.f32 %v2017, %v2081
      %v2114 = vld [vmem:[%s9] sm:$0xff]
      %v2115 = vld [vmem:[%s9 + $0x8] sm:$0xff]
      %v2116 = vld [vmem:[%s9 + $0x10] sm:$0xff]
      %v2117 = vld [vmem:[%s9 + $0x18] sm:$0xff]
      %v2118 = vld [vmem:[%s9 + $0x20] sm:$0xff]
      %v2119 = vld [vmem:[%s9 + $0x28] sm:$0xff]
      %v2120 = vld [vmem:[%s9 + $0x30] sm:$0xff]
      %v2121 = vld [vmem:[%s9 + $0x38] sm:$0xff]
      %v2122 = vld [vmem:[%s9 + $0x40] sm:$0xff]
      %v2123 = vld [vmem:[%s9 + $0x48] sm:$0xff]
      %v2124 = vld [vmem:[%s9 + $0x50] sm:$0xff]
      %v2125 = vld [vmem:[%s9 + $0x58] sm:$0xff]
      %v2126 = vld [vmem:[%s9 + $0x60] sm:$0xff]
      %v2127 = vld [vmem:[%s9 + $0x68] sm:$0xff]
      %v2128 = vld [vmem:[%s9 + $0x70] sm:$0xff]
      %v2129 = vld [vmem:[%s9 + $0x78] sm:$0xff]
      %v2130 = vmul.f32 %v2098, %v2114
      %v2131 = vmul.f32 %v2099, %v2115
      %v2132 = vmul.f32 %v2100, %v2116
      %v2133 = vmul.f32 %v2101, %v2117
      %v2134 = vmul.f32 %v2102, %v2118
      %v2135 = vmul.f32 %v2103, %v2119
      %v2136 = vmul.f32 %v2104, %v2120
      %v2137 = vmul.f32 %v2105, %v2121
      %v2138 = vmul.f32 %v2106, %v2122
      %v2139 = vmul.f32 %v2107, %v2123
      %v2140 = vmul.f32 %v2108, %v2124
      %v2141 = vmul.f32 %v2109, %v2125
      %v2142 = vmul.f32 %v2110, %v2126
      %v2143 = vmul.f32 %v2111, %v2127
      %v2144 = vmul.f32 %v2112, %v2128
      %v2145 = vmul.f32 %v2113, %v2129
      %v2146 = vsel %vm1508, %v2130, 0.0
      %2147 = vadd.xlane.f32.xlu0 %v2146
      %v2148 = vpop.xlane.xlu0 %2147
      %v2149 = vsel %vm1508, %v2131, 0.0
      %2150 = vadd.xlane.f32.xlu0 %v2149
      %v2151 = vpop.xlane.xlu0 %2150
      %v2152 = vsel %vm1508, %v2132, 0.0
      %2153 = vadd.xlane.f32.xlu0 %v2152
      %v2154 = vpop.xlane.xlu0 %2153
      %v2155 = vsel %vm1508, %v2133, 0.0
      %2156 = vadd.xlane.f32.xlu0 %v2155
      %v2157 = vpop.xlane.xlu0 %2156
      %v2158 = vsel %vm1508, %v2134, 0.0
      %2159 = vadd.xlane.f32.xlu0 %v2158
      %v2160 = vpop.xlane.xlu0 %2159
      %v2161 = vsel %vm1508, %v2135, 0.0
      %2162 = vadd.xlane.f32.xlu0 %v2161
      %v2163 = vpop.xlane.xlu0 %2162
      %v2164 = vsel %vm1508, %v2136, 0.0
      %2165 = vadd.xlane.f32.xlu0 %v2164
      %v2166 = vpop.xlane.xlu0 %2165
      %v2167 = vsel %vm1508, %v2137, 0.0
      %2168 = vadd.xlane.f32.xlu0 %v2167
      %v2169 = vpop.xlane.xlu0 %2168
      %v2170 = vsel %vm1508, %v2138, 0.0
      %2171 = vadd.xlane.f32.xlu0 %v2170
      %v2172 = vpop.xlane.xlu0 %2171
      %v2173 = vsel %vm1508, %v2139, 0.0
      %2174 = vadd.xlane.f32.xlu0 %v2173
      %v2175 = vpop.xlane.xlu0 %2174
      %v2176 = vsel %vm1508, %v2140, 0.0
      %2177 = vadd.xlane.f32.xlu0 %v2176
      %v2178 = vpop.xlane.xlu0 %2177
      %v2179 = vsel %vm1508, %v2141, 0.0
      %2180 = vadd.xlane.f32.xlu0 %v2179
      %v2181 = vpop.xlane.xlu0 %2180
      %v2182 = vsel %vm1508, %v2142, 0.0
      %2183 = vadd.xlane.f32.xlu0 %v2182
      %v2184 = vpop.xlane.xlu0 %2183
      %v2185 = vsel %vm1508, %v2143, 0.0
      %2186 = vadd.xlane.f32.xlu0 %v2185
      %v2187 = vpop.xlane.xlu0 %2186
      %v2188 = vsel %vm1508, %v2144, 0.0
      %2189 = vadd.xlane.f32.xlu0 %v2188
      %v2190 = vpop.xlane.xlu0 %2189
      %v2191 = vsel %vm1508, %v2145, 0.0
      %2192 = vadd.xlane.f32.xlu0 %v2191
      %v2193 = vpop.xlane.xlu0 %2192
      %v2210 = vlaneseq
      %v2211 = vand.u32 %v2210, 127
      %v2212 = vlaneseq
      %v2213 = vshrl.u32 %v2212, 7
      %v2214 = vsub.s32 %v2211, %v2213
      %v2215 = vrot.slane %v2148, %v2214
      %v2216 = vadd.s32 %v2211, 4294967288
      %v2217 = vlaneseq
      %v2218 = vshrl.u32 %v2217, 7
      %v2219 = vsub.s32 %v2216, %v2218
      %v2220 = vrot.slane %v2151, %v2219
      %vm2221 = vcmask 130112
      %v2222 = vsel %vm2221, %v2220, %v2215
      %v2223 = vlaneseq
      %v2224 = vshrl.u32 %v2223, 7
      %v2225 = vsub.s32 %v2211, %v2224
      %v2226 = vrot.slane %v2154, %v2225
      %v2227 = vlaneseq
      %v2228 = vshrl.u32 %v2227, 7
      %v2229 = vsub.s32 %v2216, %v2228
      %v2230 = vrot.slane %v2157, %v2229
      %v2231 = vsel %vm2221, %v2230, %v2226
      %v2232 = vlaneseq
      %v2233 = vshrl.u32 %v2232, 7
      %v2234 = vsub.s32 %v2211, %v2233
      %v2235 = vrot.slane %v2160, %v2234
      %v2236 = vlaneseq
      %v2237 = vshrl.u32 %v2236, 7
      %v2238 = vsub.s32 %v2216, %v2237
      %v2239 = vrot.slane %v2163, %v2238
      %v2240 = vsel %vm2221, %v2239, %v2235
      %v2241 = vlaneseq
      %v2242 = vshrl.u32 %v2241, 7
      %v2243 = vsub.s32 %v2211, %v2242
      %v2244 = vrot.slane %v2166, %v2243
      %v2245 = vlaneseq
      %v2246 = vshrl.u32 %v2245, 7
      %v2247 = vsub.s32 %v2216, %v2246
      %v2248 = vrot.slane %v2169, %v2247
      %v2249 = vsel %vm2221, %v2248, %v2244
      %v2250 = vlaneseq
      %v2251 = vshrl.u32 %v2250, 7
      %v2252 = vsub.s32 %v2211, %v2251
      %v2253 = vrot.slane %v2172, %v2252
      %v2254 = vlaneseq
      %v2255 = vshrl.u32 %v2254, 7
      %v2256 = vsub.s32 %v2216, %v2255
      %v2257 = vrot.slane %v2175, %v2256
      %v2258 = vsel %vm2221, %v2257, %v2253
      %v2259 = vlaneseq
      %v2260 = vshrl.u32 %v2259, 7
      %v2261 = vsub.s32 %v2211, %v2260
      %v2262 = vrot.slane %v2178, %v2261
      %v2263 = vlaneseq
      %v2264 = vshrl.u32 %v2263, 7
      %v2265 = vsub.s32 %v2216, %v2264
      %v2266 = vrot.slane %v2181, %v2265
      %v2267 = vsel %vm2221, %v2266, %v2262
      %v2268 = vlaneseq
      %v2269 = vshrl.u32 %v2268, 7
      %v2270 = vsub.s32 %v2211, %v2269
      %v2271 = vrot.slane %v2184, %v2270
      %v2272 = vlaneseq
      %v2273 = vshrl.u32 %v2272, 7
      %v2274 = vsub.s32 %v2216, %v2273
      %v2275 = vrot.slane %v2187, %v2274
      %v2276 = vsel %vm2221, %v2275, %v2271
      %v2277 = vlaneseq
      %v2278 = vshrl.u32 %v2277, 7
      %v2279 = vsub.s32 %v2211, %v2278
      %v2280 = vrot.slane %v2190, %v2279
      %v2281 = vlaneseq
      %v2282 = vshrl.u32 %v2281, 7
      %v2283 = vsub.s32 %v2216, %v2282
      %v2284 = vrot.slane %v2193, %v2283
      %v2285 = vsel %vm2221, %v2284, %v2280
      %vm2286 = vcmask 1041409
      %v2287 = vsel %vm2286, %v2231, %v2222
      %vm2288 = vcmask 1042434
      %v2289 = vsel %vm2288, %v2240, %v2287
      %vm2290 = vcmask 1043459
      %v2291 = vsel %vm2290, %v2249, %v2289
      %vm2292 = vcmask 1044484
      %v2293 = vsel %vm2292, %v2258, %v2291
      %vm2294 = vcmask 1045509
      %v2295 = vsel %vm2294, %v2267, %v2293
      %vm2296 = vcmask 1046534
      %v2297 = vsel %vm2296, %v2276, %v2295
      %vm2298 = vcmask 1047559
      %v2299 = vsel %vm2298, %v2285, %v2297
      %vm2301 = vcmask 130048
      %v2302 = vsel %vm2301, %v2299, 0.0
      %2303 = vadd.xlane.f32.xlu0 %v2302
      %v2304 = vpop.xlane.xlu0 %2303
      %s2305 = sld [smem:[#allocation2]]
      %v2306 = vstv %s2305
      %v2307 = vadd.f32 %v2304, %v2306
      %vm2308 = vcmask 7168
      %2309 = vst.msk [vmem:[%s444] sm:$0xff] %vm2308, %v2307
      %p2310 = scmp.lt.s32.totalorder %s25, 1
      %s2311 = scalar_select %p2310, %s25, 1
      %s2312 = smul.addr %s2311, 8
      %s2313 = scalar_lea.vmem %s13, %s2312
      // Predicated region
      $region73: #{brain_forward_pallas.1} parent=71 // pred_check
        %p2314 = pneg %p321
      $region74: #{brain_forward_pallas.1} parent=71 // pred_check_branch
        %2316 = sbr.rel (%p2314) target = $region76
      $region75: #{brain_forward_pallas.1} parent=71 // pred_region
        _
      $region76: #{brain_forward_pallas.1} parent=71 // pred_fallthru
        _
    $region72: #{brain_forward_pallas.1} parent=5 // pred_fallthru
      _
    %p2317 = scmp.le.s32.totalorder 2, %s20
    // Predicated region
    $region77: #{brain_forward_pallas.1} parent=5 // pred_check
      %p2318 = pneg %p2317
    $region78: #{brain_forward_pallas.1} parent=5 // pred_check_branch
      %2320 = sbr.rel (%p2318) target = $region80
    $region79: #{brain_forward_pallas.1} parent=5 // pred_region
      %s2321 = ssub.s32 %s20, 2
      // Predicated region
      $region81: #{brain_forward_pallas.1} parent=79 // pred_check
        %p2322 = pneg %p327
      $region82: #{brain_forward_pallas.1} parent=79 // pred_check_branch
        %2324 = sbr.rel (%p2322) target = $region84
      $region83: #{brain_forward_pallas.1} parent=79 // pred_region
        %p2325 = scmp.lt.s32.totalorder %s26, 1
        %s2326 = scalar_select %p2325, %s26, 1
        %s2327 = smul.addr %s2326, 8
        %s2328 = scalar_lea.vmem %s13, %s2327
      $region84: #{brain_forward_pallas.1} parent=79 // pred_fallthru
        _
    $region80: #{brain_forward_pallas.1} parent=5 // pred_fallthru
      _
  $region6: #{brain_forward_pallas.1} parent=0 // loop_footer
    %s24 = sadd.s32 1, %s20
  $region7: #{brain_forward_pallas.1} parent=0 // loop_footer_branch
    %19 = sbr.rel target = $region3
  $region8: #{brain_forward_pallas.1} parent=0 // loop_exit
    _

</llo_original>
